<compile_context>
chip_gen: v6e
topology: v6e:2x2x1
jax: 0.10.0
libtpu: 0.0.40
codegen_flags: <defaults>
</compile_context>

<pallas_src>
import functools

import jax
import jax.numpy as jnp
from jax import lax
from jax.experimental import pallas as pl
from jax.experimental.pallas import tpu as pltpu

NEG_INF = -1e30


# ----------------------- fused autoencoder kernel -----------------------
def _gat_layer(x, mask_bias, slab, f_in, f_lin, heads):
    """One MultiHeadGATConv layer (all heads + concat->Linear + ReLU) on pre-folded weights."""
    n = x.shape[0]
    wbig_cols = heads * f_lin + heads

    # Static slices of the per-layer weight slab (pure layout, no compute).
    w_big = slab[0:f_in, 0:wbig_cols]                      # [F_in, heads*F_lin + heads]
    wsrc = slab[f_in:f_in + heads, 0:f_in]                 # [heads, F_in]
    eff_b = slab[f_in + heads:f_in + heads + 1, 0:f_lin]   # [1, F_lin]

    x_bf = x.astype(jnp.bfloat16)
    # One MXU matmul yields every per-head value slab (x @ V_h) AND every dst attention term.
    big = jnp.dot(x_bf, w_big.astype(jnp.bfloat16),
                  preferred_element_type=jnp.float32)      # [N, heads*F_lin + heads]
    # All src attention terms, produced directly in [heads, N] row layout (no in-kernel transpose).
    a_src_all = lax.dot_general(wsrc.astype(jnp.bfloat16), x_bf,
                                (((1,), (1,)), ((), ())),
                                preferred_element_type=jnp.float32)   # [heads, N]

    acc = jnp.zeros((n, f_lin), jnp.float32)
    for h in range(heads):                                 # static unroll (heads is tiny)
        a_dst = big[:, heads * f_lin + h:heads * f_lin + h + 1]       # [N, 1]
        a_src = a_src_all[h:h + 1, :]                                  # [1, N]
        e = a_dst + a_src                                              # [N_dst, N_src]
        e = jnp.where(e > 0, e, 0.2 * e)                               # LeakyReLU(0.2)
        logits = e + mask_bias                                         # additive -inf mask
        m = jnp.max(logits, axis=-1, keepdims=True)
        p = jnp.exp(logits - m)
        denom = jnp.sum(p, axis=-1, keepdims=True)
        alpha = p * pl.reciprocal(denom, approx=True)

        xv = big[:, h * f_lin:(h + 1) * f_lin]                         # [N, F_lin] == x @ V_h
        # concat -> Linear is already folded into V_h, so this is the final per-head matmul.
        acc = acc + jnp.dot(alpha.astype(jnp.bfloat16), xv.astype(jnp.bfloat16),
                            preferred_element_type=jnp.float32)

    return jnp.maximum(acc + eff_b, 0.0)                   # ReLU(Linear(concat(heads)))


def autoencoder_kernel(x_ref, adj_ref, enc_ref, dec_ref, out_ref, *, enc_dims, dec_dims):
    # Additive mask bias computed once, reused by both layers and all heads.
    mask_bias = jnp.where(adj_ref[...] > 0.0, 0.0, NEG_INF).astype(jnp.float32)
    hidden = _gat_layer(x_ref[...], mask_bias, enc_ref[...], *enc_dims)    # encoder
    out_ref[...] = _gat_layer(hidden, mask_bias, dec_ref[...], *dec_dims)  # decoder


# ----------------------- parameter init (PyTorch-like layout) -----------------------
def init_multihead_gat(key, in_features, out_features, heads):
    k = jax.random.split(key, 4)
    return {
        "W": jax.random.normal(k[0], (heads, out_features, in_features), jnp.float32) * 0.1,
        "att_src": jax.random.normal(k[1], (heads, out_features), jnp.float32) * 0.1,
        "att_dst": jax.random.normal(k[2], (heads, out_features), jnp.float32) * 0.1,
        "bias": jnp.zeros((heads, out_features), jnp.float32),
        "lin_w": jax.random.normal(k[3], (out_features, heads * out_features), jnp.float32) * 0.1,
        "lin_b": jnp.zeros((out_features,), jnp.float32),
    }


def init_graph_autoencoder(key, in_features, hidden_size, heads):
    k_enc, k_dec = jax.random.split(key)
    return {
        "encoder": init_multihead_gat(k_enc, in_features, hidden_size, heads),
        "decoder": init_multihead_gat(k_dec, hidden_size, in_features, heads),
    }


# ----------------------- host-side weight folding & packing (exact linear identities) -----------------------
def _prepare_layer(p):
    heads, f_out, f_in = p["W"].shape
    f_lin = p["lin_w"].shape[0]

    wT = jnp.transpose(p["W"], (0, 2, 1))                               # [heads, F_in, F_out]
    # lin_wT[h] == lin_w[:, h*F_out:(h+1)*F_out].T
    lin_wT = jnp.transpose(p["lin_w"].reshape(f_lin, heads, f_out), (1, 2, 0))   # [heads, F_out, F_lin]

    # Fold the per-head projection into the value / attention transforms.
    V = jnp.einsum("hif,hfo->hio", wT, lin_wT)                          # [heads, F_in, F_lin]
    wdst = jnp.einsum("hif,hf->ih", wT, p["att_dst"])                   # [F_in, heads]
    wsrc = jnp.einsum("hif,hf->hi", wT, p["att_src"])                   # [heads, F_in]
    # Fold the per-head GATConv bias into the output bias:
    #   Linear(concat_h(out_h + b_h)) = sum_h out_h @ lin_wT_h + (lin_b + sum_h b_h @ lin_wT_h)
    eff_b = p["lin_b"] + jnp.einsum("hf,hfo->o", p["bias"], lin_wT)     # [F_lin]

    wbig_cols = heads * f_lin + heads
    w_big = jnp.concatenate(
        [jnp.transpose(V, (1, 0, 2)).reshape(f_in, heads * f_lin), wdst], axis=1)   # [F_in, wbig_cols]

    # Single flat slab per layer -> one DMA instead of many sub-KiB transfers.
    rows = f_in + heads + 1
    cols = max(wbig_cols, f_in, f_lin)
    slab = jnp.zeros((rows, cols), jnp.float32)
    slab = slab.at[0:f_in, 0:wbig_cols].set(w_big)
    slab = slab.at[f_in:f_in + heads, 0:f_in].set(wsrc)
    slab = slab.at[f_in + heads, 0:f_lin].set(eff_b)
    return slab, (f_in, f_lin, heads)


def graph_autoencoder_forward(params, x, adj):
    enc_slab, enc_dims = _prepare_layer(params["encoder"])
    dec_slab, dec_dims = _prepare_layer(params["decoder"])
    n = x.shape[0]
    out_f = dec_dims[1]

    kernel = functools.partial(autoencoder_kernel, enc_dims=enc_dims, dec_dims=dec_dims)
    vmem = pl.BlockSpec(memory_space=pltpu.MemorySpace.VMEM)
    return pl.pallas_call(
        kernel,
        out_shape=jax.ShapeDtypeStruct((n, out_f), jnp.float32),
        in_specs=[vmem] * 4,
        out_specs=vmem,
    )(x, adj, enc_slab, dec_slab)


# ----------------------- demo -----------------------
if __name__ == "__main__":
    key = jax.random.PRNGKey(0)
    k_param, k_edge, k_x = jax.random.split(key, 3)

    N = 64            # number of graph nodes (genes)
    IN_FEATURES = 4   # node feature dim
    HIDDEN = 32
    HEADS = 2
    E = 256           # number of directed edges

    # Deterministic synthetic graph: edge_index [2, E] -> dense adjacency adj[dst, src].
    # (Replaces the CSV-loaded SL gene-pair edge list of the original script.)
    edge_index = jax.random.randint(k_edge, (2, E), 0, N, dtype=jnp.int32)
    src, dst = edge_index[0], edge_index[1]
    adj = jnp.zeros((N, N), jnp.float32).at[dst, src].set(1.0)
    adj = jnp.maximum(adj, jnp.eye(N, dtype=jnp.float32))  # add_self_loops=True

    x = jax.random.normal(k_x, (N, IN_FEATURES), jnp.float32)
    params = init_graph_autoencoder(k_param, IN_FEATURES, HIDDEN, HEADS)

    fwd = jax.jit(graph_autoencoder_forward)
    out = fwd(params, x, adj)
    jax.block_until_ready(out)
    assert out.shape == (N, IN_FEATURES) and out.dtype == jnp.float32
    assert bool(jnp.isfinite(out).all())
    print("KERNEL_OK")
</pallas_src>

<mosaic_0001>
module attributes {stable_mosaic.version = 11 : i64} {
  func.func @autoencoder_kernel(%arg0: memref<64x4xf32, #tpu.memory_space<vmem>>, %arg1: memref<64x64xf32, #tpu.memory_space<vmem>>, %arg2: memref<7x66xf32, #tpu.memory_space<vmem>>, %arg3: memref<35x32xf32, #tpu.memory_space<vmem>>, %arg4: memref<64x4xf32, #tpu.memory_space<vmem>>) attributes {dimension_semantics = [], scalar_prefetch = 0 : i64, scratch_operands = 0 : i64, tpu.core_type = #tpu.core_type<tc>} {
    %c0 = arith.constant 0 : index
    %c0_0 = arith.constant 0 : index
    %0 = vector.load %arg1[%c0, %c0_0] : memref<64x64xf32, #tpu.memory_space<vmem>>, vector<64x64xf32>
    %cst = arith.constant 0.000000e+00 : f32
    %1 = vector.broadcast %cst : f32 to vector<64x64xf32>
    %2 = arith.cmpf ogt, %0, %1 : vector<64x64xf32>
    %cst_1 = arith.constant 0.000000e+00 : f32
    %cst_2 = arith.constant -1.000000e+30 : f32
    %3 = vector.broadcast %cst_1 : f32 to vector<64x64xf32>
    %4 = vector.broadcast %cst_2 : f32 to vector<64x64xf32>
    %5 = arith.select %2, %3, %4 : vector<64x64xi1>, vector<64x64xf32>
    %c0_3 = arith.constant 0 : index
    %c0_4 = arith.constant 0 : index
    %6 = vector.load %arg0[%c0_3, %c0_4] : memref<64x4xf32, #tpu.memory_space<vmem>>, vector<64x4xf32>
    %c0_5 = arith.constant 0 : index
    %c0_6 = arith.constant 0 : index
    %7 = vector.load %arg2[%c0_5, %c0_6] : memref<7x66xf32, #tpu.memory_space<vmem>>, vector<7x66xf32>
    %8 = vector.extract_strided_slice %7 {offsets = [0, 0], sizes = [4, 66], strides = [1, 1]} : vector<7x66xf32> to vector<4x66xf32>
    %9 = vector.extract_strided_slice %7 {offsets = [4, 0], sizes = [2, 4], strides = [1, 1]} : vector<7x66xf32> to vector<2x4xf32>
    %10 = vector.extract_strided_slice %7 {offsets = [6, 0], sizes = [1, 32], strides = [1, 1]} : vector<7x66xf32> to vector<1x32xf32>
    %11 = arith.truncf %6 : vector<64x4xf32> to vector<64x4xbf16>
    %12 = arith.truncf %8 : vector<4x66xf32> to vector<4x66xbf16>
    %cst_7 = arith.constant dense<0.000000e+00> : vector<64x66xf32>
    %13 = tpu.matmul %11, %12, %cst_7 {dimension_numbers = #tpu.dot_dimension_numbers<[1], [0], [0], [1], [0, 0, 1, 1], [], []>} : vector<64x4xbf16>, vector<4x66xbf16>, vector<64x66xf32> -> vector<64x66xf32>
    %14 = arith.truncf %9 : vector<2x4xf32> to vector<2x4xbf16>
    %cst_8 = arith.constant dense<0.000000e+00> : vector<2x64xf32>
    %15 = tpu.matmul %14, %11, %cst_8 {dimension_numbers = #tpu.dot_dimension_numbers<[1], [1], [0], [0], [0, 0, 1, 0], [], []>} : vector<2x4xbf16>, vector<64x4xbf16>, vector<2x64xf32> -> vector<2x64xf32>
    %cst_9 = arith.constant 0.000000e+00 : f32
    %16 = vector.broadcast %cst_9 : f32 to vector<64x32xf32>
    %17 = vector.extract_strided_slice %13 {offsets = [0, 64], sizes = [64, 1], strides = [1, 1]} : vector<64x66xf32> to vector<64x1xf32>
    %18 = vector.extract_strided_slice %15 {offsets = [0, 0], sizes = [1, 64], strides = [1, 1]} : vector<2x64xf32> to vector<1x64xf32>
    %19 = vector.broadcast %17 : vector<64x1xf32> to vector<64x64xf32>
    %20 = vector.broadcast %18 : vector<1x64xf32> to vector<64x64xf32>
    %21 = arith.addf %19, %20 : vector<64x64xf32>
    %cst_10 = arith.constant 0.000000e+00 : f32
    %22 = vector.broadcast %cst_10 : f32 to vector<64x64xf32>
    %23 = arith.cmpf ogt, %21, %22 : vector<64x64xf32>
    %cst_11 = arith.constant 2.000000e-01 : f32
    %24 = vector.broadcast %cst_11 : f32 to vector<64x64xf32>
    %25 = arith.mulf %24, %21 : vector<64x64xf32>
    %26 = arith.select %23, %21, %25 : vector<64x64xi1>, vector<64x64xf32>
    %27 = arith.addf %26, %5 : vector<64x64xf32>
    %cst_12 = arith.constant dense<0xFF800000> : vector<64xf32>
    %28 = vector.multi_reduction <maximumf>, %27, %cst_12 [1] : vector<64x64xf32> to vector<64xf32>
    %29 = vector.shape_cast %28 : vector<64xf32> to vector<64x1xf32>
    %30 = vector.broadcast %29 : vector<64x1xf32> to vector<64x64xf32>
    %31 = arith.subf %27, %30 : vector<64x64xf32>
    %32 = math.exp %31 : vector<64x64xf32>
    %cst_13 = arith.constant dense<0.000000e+00> : vector<64xf32>
    %33 = vector.multi_reduction <add>, %32, %cst_13 [1] : vector<64x64xf32> to vector<64xf32>
    %34 = vector.shape_cast %33 : vector<64xf32> to vector<64x1xf32>
    %35 = tpu.reciprocal %34 {approx = true} : vector<64x1xf32> -> vector<64x1xf32>
    %36 = vector.broadcast %35 : vector<64x1xf32> to vector<64x64xf32>
    %37 = arith.mulf %32, %36 : vector<64x64xf32>
    %38 = vector.extract_strided_slice %13 {offsets = [0, 0], sizes = [64, 32], strides = [1, 1]} : vector<64x66xf32> to vector<64x32xf32>
    %39 = arith.truncf %37 : vector<64x64xf32> to vector<64x64xbf16>
    %40 = arith.truncf %38 : vector<64x32xf32> to vector<64x32xbf16>
    %cst_14 = arith.constant dense<0.000000e+00> : vector<64x32xf32>
    %41 = tpu.matmul %39, %40, %cst_14 {dimension_numbers = #tpu.dot_dimension_numbers<[1], [0], [0], [1], [0, 0, 1, 1], [], []>} : vector<64x64xbf16>, vector<64x32xbf16>, vector<64x32xf32> -> vector<64x32xf32>
    %42 = arith.addf %16, %41 : vector<64x32xf32>
    %43 = vector.extract_strided_slice %13 {offsets = [0, 65], sizes = [64, 1], strides = [1, 1]} : vector<64x66xf32> to vector<64x1xf32>
    %44 = vector.extract_strided_slice %15 {offsets = [1, 0], sizes = [1, 64], strides = [1, 1]} : vector<2x64xf32> to vector<1x64xf32>
    %45 = vector.broadcast %43 : vector<64x1xf32> to vector<64x64xf32>
    %46 = vector.broadcast %44 : vector<1x64xf32> to vector<64x64xf32>
    %47 = arith.addf %45, %46 : vector<64x64xf32>
    %cst_15 = arith.constant 0.000000e+00 : f32
    %48 = vector.broadcast %cst_15 : f32 to vector<64x64xf32>
    %49 = arith.cmpf ogt, %47, %48 : vector<64x64xf32>
    %cst_16 = arith.constant 2.000000e-01 : f32
    %50 = vector.broadcast %cst_16 : f32 to vector<64x64xf32>
    %51 = arith.mulf %50, %47 : vector<64x64xf32>
    %52 = arith.select %49, %47, %51 : vector<64x64xi1>, vector<64x64xf32>
    %53 = arith.addf %52, %5 : vector<64x64xf32>
    %cst_17 = arith.constant dense<0xFF800000> : vector<64xf32>
    %54 = vector.multi_reduction <maximumf>, %53, %cst_17 [1] : vector<64x64xf32> to vector<64xf32>
    %55 = vector.shape_cast %54 : vector<64xf32> to vector<64x1xf32>
    %56 = vector.broadcast %55 : vector<64x1xf32> to vector<64x64xf32>
    %57 = arith.subf %53, %56 : vector<64x64xf32>
    %58 = math.exp %57 : vector<64x64xf32>
    %cst_18 = arith.constant dense<0.000000e+00> : vector<64xf32>
    %59 = vector.multi_reduction <add>, %58, %cst_18 [1] : vector<64x64xf32> to vector<64xf32>
    %60 = vector.shape_cast %59 : vector<64xf32> to vector<64x1xf32>
    %61 = tpu.reciprocal %60 {approx = true} : vector<64x1xf32> -> vector<64x1xf32>
    %62 = vector.broadcast %61 : vector<64x1xf32> to vector<64x64xf32>
    %63 = arith.mulf %58, %62 : vector<64x64xf32>
    %64 = vector.extract_strided_slice %13 {offsets = [0, 32], sizes = [64, 32], strides = [1, 1]} : vector<64x66xf32> to vector<64x32xf32>
    %65 = arith.truncf %63 : vector<64x64xf32> to vector<64x64xbf16>
    %66 = arith.truncf %64 : vector<64x32xf32> to vector<64x32xbf16>
    %cst_19 = arith.constant dense<0.000000e+00> : vector<64x32xf32>
    %67 = tpu.matmul %65, %66, %cst_19 {dimension_numbers = #tpu.dot_dimension_numbers<[1], [0], [0], [1], [0, 0, 1, 1], [], []>} : vector<64x64xbf16>, vector<64x32xbf16>, vector<64x32xf32> -> vector<64x32xf32>
    %68 = arith.addf %42, %67 : vector<64x32xf32>
    %69 = vector.broadcast %10 : vector<1x32xf32> to vector<64x32xf32>
    %70 = arith.addf %68, %69 : vector<64x32xf32>
    %cst_20 = arith.constant 0.000000e+00 : f32
    %71 = vector.broadcast %cst_20 : f32 to vector<64x32xf32>
    %72 = arith.maximumf %70, %71 : vector<64x32xf32>
    %c0_21 = arith.constant 0 : index
    %c0_22 = arith.constant 0 : index
    %73 = vector.load %arg3[%c0_21, %c0_22] : memref<35x32xf32, #tpu.memory_space<vmem>>, vector<35x32xf32>
    %74 = vector.extract_strided_slice %73 {offsets = [0, 0], sizes = [32, 10], strides = [1, 1]} : vector<35x32xf32> to vector<32x10xf32>
    %75 = vector.extract_strided_slice %73 {offsets = [32, 0], sizes = [2, 32], strides = [1, 1]} : vector<35x32xf32> to vector<2x32xf32>
    %76 = vector.extract_strided_slice %73 {offsets = [34, 0], sizes = [1, 4], strides = [1, 1]} : vector<35x32xf32> to vector<1x4xf32>
    %77 = arith.truncf %72 : vector<64x32xf32> to vector<64x32xbf16>
    %78 = arith.truncf %74 : vector<32x10xf32> to vector<32x10xbf16>
    %cst_23 = arith.constant dense<0.000000e+00> : vector<64x10xf32>
    %79 = tpu.matmul %77, %78, %cst_23 {dimension_numbers = #tpu.dot_dimension_numbers<[1], [0], [0], [1], [0, 0, 1, 1], [], []>} : vector<64x32xbf16>, vector<32x10xbf16>, vector<64x10xf32> -> vector<64x10xf32>
    %80 = arith.truncf %75 : vector<2x32xf32> to vector<2x32xbf16>
    %cst_24 = arith.constant dense<0.000000e+00> : vector<2x64xf32>
    %81 = tpu.matmul %80, %77, %cst_24 {dimension_numbers = #tpu.dot_dimension_numbers<[1], [1], [0], [0], [0, 0, 1, 0], [], []>} : vector<2x32xbf16>, vector<64x32xbf16>, vector<2x64xf32> -> vector<2x64xf32>
    %cst_25 = arith.constant 0.000000e+00 : f32
    %82 = vector.broadcast %cst_25 : f32 to vector<64x4xf32>
    %83 = vector.extract_strided_slice %79 {offsets = [0, 8], sizes = [64, 1], strides = [1, 1]} : vector<64x10xf32> to vector<64x1xf32>
    %84 = vector.extract_strided_slice %81 {offsets = [0, 0], sizes = [1, 64], strides = [1, 1]} : vector<2x64xf32> to vector<1x64xf32>
    %85 = vector.broadcast %83 : vector<64x1xf32> to vector<64x64xf32>
    %86 = vector.broadcast %84 : vector<1x64xf32> to vector<64x64xf32>
    %87 = arith.addf %85, %86 : vector<64x64xf32>
    %cst_26 = arith.constant 0.000000e+00 : f32
    %88 = vector.broadcast %cst_26 : f32 to vector<64x64xf32>
    %89 = arith.cmpf ogt, %87, %88 : vector<64x64xf32>
    %cst_27 = arith.constant 2.000000e-01 : f32
    %90 = vector.broadcast %cst_27 : f32 to vector<64x64xf32>
    %91 = arith.mulf %90, %87 : vector<64x64xf32>
    %92 = arith.select %89, %87, %91 : vector<64x64xi1>, vector<64x64xf32>
    %93 = arith.addf %92, %5 : vector<64x64xf32>
    %cst_28 = arith.constant dense<0xFF800000> : vector<64xf32>
    %94 = vector.multi_reduction <maximumf>, %93, %cst_28 [1] : vector<64x64xf32> to vector<64xf32>
    %95 = vector.shape_cast %94 : vector<64xf32> to vector<64x1xf32>
    %96 = vector.broadcast %95 : vector<64x1xf32> to vector<64x64xf32>
    %97 = arith.subf %93, %96 : vector<64x64xf32>
    %98 = math.exp %97 : vector<64x64xf32>
    %cst_29 = arith.constant dense<0.000000e+00> : vector<64xf32>
    %99 = vector.multi_reduction <add>, %98, %cst_29 [1] : vector<64x64xf32> to vector<64xf32>
    %100 = vector.shape_cast %99 : vector<64xf32> to vector<64x1xf32>
    %101 = tpu.reciprocal %100 {approx = true} : vector<64x1xf32> -> vector<64x1xf32>
    %102 = vector.broadcast %101 : vector<64x1xf32> to vector<64x64xf32>
    %103 = arith.mulf %98, %102 : vector<64x64xf32>
    %104 = vector.extract_strided_slice %79 {offsets = [0, 0], sizes = [64, 4], strides = [1, 1]} : vector<64x10xf32> to vector<64x4xf32>
    %105 = arith.truncf %103 : vector<64x64xf32> to vector<64x64xbf16>
    %106 = arith.truncf %104 : vector<64x4xf32> to vector<64x4xbf16>
    %cst_30 = arith.constant dense<0.000000e+00> : vector<64x4xf32>
    %107 = tpu.matmul %105, %106, %cst_30 {dimension_numbers = #tpu.dot_dimension_numbers<[1], [0], [0], [1], [0, 0, 1, 1], [], []>} : vector<64x64xbf16>, vector<64x4xbf16>, vector<64x4xf32> -> vector<64x4xf32>
    %108 = arith.addf %82, %107 : vector<64x4xf32>
    %109 = vector.extract_strided_slice %79 {offsets = [0, 9], sizes = [64, 1], strides = [1, 1]} : vector<64x10xf32> to vector<64x1xf32>
    %110 = vector.extract_strided_slice %81 {offsets = [1, 0], sizes = [1, 64], strides = [1, 1]} : vector<2x64xf32> to vector<1x64xf32>
    %111 = vector.broadcast %109 : vector<64x1xf32> to vector<64x64xf32>
    %112 = vector.broadcast %110 : vector<1x64xf32> to vector<64x64xf32>
    %113 = arith.addf %111, %112 : vector<64x64xf32>
    %cst_31 = arith.constant 0.000000e+00 : f32
    %114 = vector.broadcast %cst_31 : f32 to vector<64x64xf32>
    %115 = arith.cmpf ogt, %113, %114 : vector<64x64xf32>
    %cst_32 = arith.constant 2.000000e-01 : f32
    %116 = vector.broadcast %cst_32 : f32 to vector<64x64xf32>
    %117 = arith.mulf %116, %113 : vector<64x64xf32>
    %118 = arith.select %115, %113, %117 : vector<64x64xi1>, vector<64x64xf32>
    %119 = arith.addf %118, %5 : vector<64x64xf32>
    %cst_33 = arith.constant dense<0xFF800000> : vector<64xf32>
    %120 = vector.multi_reduction <maximumf>, %119, %cst_33 [1] : vector<64x64xf32> to vector<64xf32>
    %121 = vector.shape_cast %120 : vector<64xf32> to vector<64x1xf32>
    %122 = vector.broadcast %121 : vector<64x1xf32> to vector<64x64xf32>
    %123 = arith.subf %119, %122 : vector<64x64xf32>
    %124 = math.exp %123 : vector<64x64xf32>
    %cst_34 = arith.constant dense<0.000000e+00> : vector<64xf32>
    %125 = vector.multi_reduction <add>, %124, %cst_34 [1] : vector<64x64xf32> to vector<64xf32>
    %126 = vector.shape_cast %125 : vector<64xf32> to vector<64x1xf32>
    %127 = tpu.reciprocal %126 {approx = true} : vector<64x1xf32> -> vector<64x1xf32>
    %128 = vector.broadcast %127 : vector<64x1xf32> to vector<64x64xf32>
    %129 = arith.mulf %124, %128 : vector<64x64xf32>
    %130 = vector.extract_strided_slice %79 {offsets = [0, 4], sizes = [64, 4], strides = [1, 1]} : vector<64x10xf32> to vector<64x4xf32>
    %131 = arith.truncf %129 : vector<64x64xf32> to vector<64x64xbf16>
    %132 = arith.truncf %130 : vector<64x4xf32> to vector<64x4xbf16>
    %cst_35 = arith.constant dense<0.000000e+00> : vector<64x4xf32>
    %133 = tpu.matmul %131, %132, %cst_35 {dimension_numbers = #tpu.dot_dimension_numbers<[1], [0], [0], [1], [0, 0, 1, 1], [], []>} : vector<64x64xbf16>, vector<64x4xbf16>, vector<64x4xf32> -> vector<64x4xf32>
    %134 = arith.addf %108, %133 : vector<64x4xf32>
    %135 = vector.broadcast %76 : vector<1x4xf32> to vector<64x4xf32>
    %136 = arith.addf %134, %135 : vector<64x4xf32>
    %cst_36 = arith.constant 0.000000e+00 : f32
    %137 = vector.broadcast %cst_36 : f32 to vector<64x4xf32>
    %138 = arith.maximumf %136, %137 : vector<64x4xf32>
    %c0_37 = arith.constant 0 : index
    %c0_38 = arith.constant 0 : index
    %139 = vector.load %arg4[%c0_37, %c0_38] : memref<64x4xf32, #tpu.memory_space<vmem>>, vector<64x4xf32>
    tpu.vector_store %arg4[%c0_37, %c0_38], %138 {strides = array<i32>} : memref<64x4xf32, #tpu.memory_space<vmem>>, vector<64x4xf32>,
    return
  }
}

</mosaic_0001>

<llo_original>
// kernel: graph_autoencoder_forward.1
$region0: #{graph_autoencoder_forward.1}
  #allocation0 [shape = 'u32[]', space=smem, size = 0x4, offset = 0x4, fixed_abs, tag = 'smem constant byte address 0x4 - core index']
  #allocation1 [shape = 'u32[144,128]{1,0:T(1,128)}', space=vmem, size = 0x12000, scoped, tag = 'internal scratch']
  %s0 = inlined_call_operand.vmem [shape: f32[64,4], index: 0, kind: input, shape index: {}]
  %s1 = inlined_call_operand.vmem [shape: f32[64,64], index: 1, kind: input, shape index: {}]
  %s2 = inlined_call_operand.vmem [shape: f32[7,66], index: 2, kind: input, shape index: {}]
  %s3 = inlined_call_operand.vmem [shape: f32[35,32], index: 3, kind: input, shape index: {}]
  %s4 = inlined_call_operand.vmem [shape: f32[64,4], index: 4, kind: output, shape index: {}]
  %s5 = sld [smem:[#allocation0]]
  $region26: #{graph_autoencoder_forward.1} parent=0
    _
  %s7 = ssub.s32 1, %s5
  %s8 = scalar_select 0, %s7, %s5
  // Predicated region
  $region2: #{graph_autoencoder_forward.1} parent=0 // pred_check
    _
  $region3: #{graph_autoencoder_forward.1} parent=0 // pred_check_branch
    %10 = sbr.rel (0) target = $region5
  $region4: #{graph_autoencoder_forward.1} parent=0 // pred_region
    _
  $region5: #{graph_autoencoder_forward.1} parent=0 // pred_fallthru
    _
  // Predicated region
  $region6: #{graph_autoencoder_forward.1} parent=0 // pred_check
    _
  $region7: #{graph_autoencoder_forward.1} parent=0 // pred_check_branch
    %12 = sbr.rel (0) target = $region9
  $region8: #{graph_autoencoder_forward.1} parent=0 // pred_region
    _
  $region9: #{graph_autoencoder_forward.1} parent=0 // pred_fallthru
    _
  // Predicated region
  $region10: #{graph_autoencoder_forward.1} parent=0 // pred_check
    _
  $region11: #{graph_autoencoder_forward.1} parent=0 // pred_check_branch
    %14 = sbr.rel (0) target = $region13
  $region12: #{graph_autoencoder_forward.1} parent=0 // pred_region
    _
  $region13: #{graph_autoencoder_forward.1} parent=0 // pred_fallthru
    _
  // Predicated region
  $region14: #{graph_autoencoder_forward.1} parent=0 // pred_check
    _
  $region15: #{graph_autoencoder_forward.1} parent=0 // pred_check_branch
    %16 = sbr.rel (0) target = $region17
  $region16: #{graph_autoencoder_forward.1} parent=0 // pred_region
    _
  $region17: #{graph_autoencoder_forward.1} parent=0 // pred_fallthru
    _
  %v18 = vld [vmem:[%s1] sm:$0xff]
  %v19 = vld [vmem:[%s1 + $0x8] sm:$0xff]
  %v20 = vld [vmem:[%s1 + $0x10] sm:$0xff]
  %v21 = vld [vmem:[%s1 + $0x18] sm:$0xff]
  %v22 = vld [vmem:[%s1 + $0x20] sm:$0xff]
  %v23 = vld [vmem:[%s1 + $0x28] sm:$0xff]
  %v24 = vld [vmem:[%s1 + $0x30] sm:$0xff]
  %v25 = vld [vmem:[%s1 + $0x38] sm:$0xff]
  %vm26 = vcmp.gt.f32.partialorder %v18, 0.0
  %vm27 = vcmp.gt.f32.partialorder %v19, 0.0
  %vm28 = vcmp.gt.f32.partialorder %v20, 0.0
  %vm29 = vcmp.gt.f32.partialorder %v21, 0.0
  %vm30 = vcmp.gt.f32.partialorder %v22, 0.0
  %vm31 = vcmp.gt.f32.partialorder %v23, 0.0
  %vm32 = vcmp.gt.f32.partialorder %v24, 0.0
  %vm33 = vcmp.gt.f32.partialorder %v25, 0.0
  %v34 = vsel %vm26, 0.0, -1e+30
  %v35 = vsel %vm27, 0.0, -1e+30
  %v36 = vsel %vm28, 0.0, -1e+30
  %v37 = vsel %vm29, 0.0, -1e+30
  %v38 = vsel %vm30, 0.0, -1e+30
  %v39 = vsel %vm31, 0.0, -1e+30
  %v40 = vsel %vm32, 0.0, -1e+30
  %v41 = vsel %vm33, 0.0, -1e+30
  %v42 = vld [vmem:[%s0] sm:$0xff]
  %v43 = vld [vmem:[%s0 + $0x8] sm:$0xff]
  %v44 = vld [vmem:[%s0 + $0x10] sm:$0xff]
  %v45 = vld [vmem:[%s0 + $0x18] sm:$0xff]
  %v46 = vld [vmem:[%s0 + $0x20] sm:$0xff]
  %v47 = vld [vmem:[%s0 + $0x28] sm:$0xff]
  %v48 = vld [vmem:[%s0 + $0x30] sm:$0xff]
  %v49 = vld [vmem:[%s0 + $0x38] sm:$0xff]
  %v50 = vld [vmem:[%s2] sm:$0x7f]
  %v51 = vpack.c.bf16 %v43, %v42
  %v52 = vpack.c.bf16 %v45, %v44
  %v53 = vpack.c.bf16 %v47, %v46
  %v54 = vpack.c.bf16 %v49, %v48
  %v55 = vpack.c.bf16 %v50, %v50
  %vm56 = vcmask 31744
  %v58 = vsel %vm56, %v51, 0
  %v61 = vsel %vm56, %v52, 0
  %v64 = vsel %vm56, %v53, 0
  %v67 = vsel %vm56, %v54, 0
  %vm69 = vcmask 1041408
  %v71 = vsel %vm69, %v55, 0
  %73 = vmatprep.subr.bf16.mxu0 0
  %74 = vmatpush1.bf16.msra.mxu0 0
  %75 = vmatprep.subr.bf16.mxu0 0
  %76 = vmatpush1.bf16.msra.mxu0 0
  %77 = vmatprep.subr.bf16.mxu0 0
  %78 = vmatpush1.bf16.msra.mxu0 0
  %79 = vmatprep.subr.bf16.mxu0 0
  %80 = vmatpush1.bf16.msra.mxu0 0
  %81 = vmatprep.subr.bf16.mxu0 0
  %82 = vmatpush1.bf16.msra.mxu0 0
  %83 = vmatprep.subr.bf16.mxu0 0
  %84 = vmatpush1.bf16.msra.mxu0 0
  %85 = vmatprep.subr.bf16.mxu0 0
  %86 = vmatpush1.bf16.msra.mxu0 0
  %87 = vmatprep.subr.bf16.mxu0 0
  %88 = vmatpush1.bf16.msra.mxu0 %v71
  %89 = vmatprep.subr.bf16.mxu0 0
  %90 = vmatpush2.bf16.msra.mxu0 0
  %91 = vmatprep.subr.bf16.mxu0 0
  %92 = vmatpush2.bf16.msra.mxu0 0
  %93 = vmatprep.subr.bf16.mxu0 0
  %94 = vmatpush2.bf16.msra.mxu0 0
  %95 = vmatprep.subr.bf16.mxu0 0
  %96 = vmatpush2.bf16.msra.mxu0 0
  %97 = vmatprep.subr.bf16.mxu0 0
  %98 = vmatpush2.bf16.msra.mxu0 0
  %99 = vmatprep.subr.bf16.mxu0 0
  %100 = vmatpush2.bf16.msra.mxu0 0
  %101 = vmatprep.subr.bf16.mxu0 0
  %102 = vmatpush2.bf16.msra.mxu0 0
  %103 = vmatprep.subr.bf16.mxu0 0
  %104 = vmatpush2.bf16.msra.mxu0 0
  %105 = vmatprep.mubr.bf16.mxu0 0
  %106 = vmatmul.mubr.bf16.gmra.mxu0 %v58
  %v107 = vpop.f32.mrf.mxu0
  %v108 = vadd.f32 0.0, %v107
  %v109 = vpop.f32.mrf.mxu0
  %v110 = vpop.f32.mrf.mxu0
  %v111 = vadd.f32 0.0, %v110
  %v112 = vpop.f32.mrf.mxu0
  %113 = vmatprep.mubr.bf16.mxu0 0
  %114 = vmatmul.mubr.bf16.gmra.mxu0 %v61
  %v115 = vpop.f32.mrf.mxu0
  %v116 = vadd.f32 0.0, %v115
  %v117 = vpop.f32.mrf.mxu0
  %v118 = vpop.f32.mrf.mxu0
  %v119 = vadd.f32 0.0, %v118
  %v120 = vpop.f32.mrf.mxu0
  %121 = vmatprep.mubr.bf16.mxu0 0
  %122 = vmatmul.mubr.bf16.gmra.mxu0 %v64
  %v123 = vpop.f32.mrf.mxu0
  %v124 = vadd.f32 0.0, %v123
  %v125 = vpop.f32.mrf.mxu0
  %v126 = vpop.f32.mrf.mxu0
  %v127 = vadd.f32 0.0, %v126
  %v128 = vpop.f32.mrf.mxu0
  %129 = vmatprep.mubr.bf16.mxu0 0
  %130 = vmatmul.mubr.bf16.gmra.mxu0 %v67
  %v131 = vpop.f32.mrf.mxu0
  %v132 = vadd.f32 0.0, %v131
  %v133 = vpop.f32.mrf.mxu0
  %v134 = vpop.f32.mrf.mxu0
  %v135 = vadd.f32 0.0, %v134
  %v136 = vpop.f32.mrf.mxu0
  %137 = vdwg.mxu0
  %v139 = vrot.slane %v55, 2
  %v141 = vsel %vm56, %v139, 0
  %143 = vmatprep.subr.bf16.mxu0 0
  %144 = vmatpush1.bf16.xpose.msra.mxu0 0
  %145 = vmatprep.subr.bf16.mxu0 0
  %146 = vmatpush1.bf16.xpose.msra.mxu0 0
  %147 = vmatprep.subr.bf16.mxu0 0
  %148 = vmatpush1.bf16.xpose.msra.mxu0 0
  %149 = vmatprep.subr.bf16.mxu0 0
  %150 = vmatpush1.bf16.xpose.msra.mxu0 0
  %151 = vmatprep.subr.bf16.mxu0 0
  %152 = vmatpush1.bf16.xpose.msra.mxu0 %v67
  %153 = vmatprep.subr.bf16.mxu0 0
  %154 = vmatpush1.bf16.xpose.msra.mxu0 %v64
  %155 = vmatprep.subr.bf16.mxu0 0
  %156 = vmatpush1.bf16.xpose.msra.mxu0 %v61
  %157 = vmatprep.subr.bf16.mxu0 0
  %158 = vmatpush1.bf16.xpose.msra.mxu0 %v58
  %159 = vmatprep.subr.bf16.mxu0 0
  %160 = vmatpush2.bf16.xpose.msra.mxu0 0
  %161 = vmatprep.subr.bf16.mxu0 0
  %162 = vmatpush2.bf16.xpose.msra.mxu0 0
  %163 = vmatprep.subr.bf16.mxu0 0
  %164 = vmatpush2.bf16.xpose.msra.mxu0 0
  %165 = vmatprep.subr.bf16.mxu0 0
  %166 = vmatpush2.bf16.xpose.msra.mxu0 0
  %167 = vmatprep.subr.bf16.mxu0 0
  %168 = vmatpush2.bf16.xpose.msra.mxu0 0
  %169 = vmatprep.subr.bf16.mxu0 0
  %170 = vmatpush2.bf16.xpose.msra.mxu0 0
  %171 = vmatprep.subr.bf16.mxu0 0
  %172 = vmatpush2.bf16.xpose.msra.mxu0 0
  %173 = vmatprep.subr.bf16.mxu0 0
  %174 = vmatpush2.bf16.xpose.msra.mxu0 0
  %175 = vmatprep.mubr.bf16.mxu0 0
  %176 = vmatmul.mubr.bf16.gmra.mxu0 %v141
  %v177 = vpop.f32.mrf.mxu0
  %v178 = vadd.f32 0.0, %v177
  %v179 = vpop.f32.mrf.mxu0
  %v180 = vpop.f32.mrf.mxu0
  %v181 = vpop.f32.mrf.mxu0
  %182 = vdwg.mxu0
  %184 = vset.pattern.permute.xlu0 64
  %185 = vperm.xlu0 %184, %v108
  %v186 = vpop.permute.xlu0 %185
  %189 = vset.pattern.permute.xlu0 64
  %190 = vperm.xlu0 %189, %v111
  %v191 = vpop.permute.xlu0 %190
  %194 = vset.pattern.permute.xlu0 64
  %195 = vperm.xlu0 %194, %v116
  %v196 = vpop.permute.xlu0 %195
  %199 = vset.pattern.permute.xlu0 64
  %200 = vperm.xlu0 %199, %v119
  %v201 = vpop.permute.xlu0 %200
  %204 = vset.pattern.permute.xlu0 64
  %205 = vperm.xlu0 %204, %v124
  %v206 = vpop.permute.xlu0 %205
  %209 = vset.pattern.permute.xlu0 64
  %210 = vperm.xlu0 %209, %v127
  %v211 = vpop.permute.xlu0 %210
  %214 = vset.pattern.permute.xlu0 64
  %215 = vperm.xlu0 %214, %v132
  %v216 = vpop.permute.xlu0 %215
  %219 = vset.pattern.permute.xlu0 64
  %220 = vperm.xlu0 %219, %v135
  %v221 = vpop.permute.xlu0 %220
  %v223 = vlaneseq
  %v224 = vshrl.u32 %v223, 7
  %v225 = vsub.s32 0, %v224
  %v226 = vrot.slane %v178, %v225
  %v227 = vadd.f32 %v186, %v226
  %v228 = vadd.f32 %v191, %v226
  %v229 = vadd.f32 %v196, %v226
  %v230 = vadd.f32 %v201, %v226
  %v231 = vadd.f32 %v206, %v226
  %v232 = vadd.f32 %v211, %v226
  %v233 = vadd.f32 %v216, %v226
  %v234 = vadd.f32 %v221, %v226
  %vm235 = vcmp.gt.f32.partialorder %v227, 0.0
  %vm236 = vcmp.gt.f32.partialorder %v228, 0.0
  %vm237 = vcmp.gt.f32.partialorder %v229, 0.0
  %vm238 = vcmp.gt.f32.partialorder %v230, 0.0
  %vm239 = vcmp.gt.f32.partialorder %v231, 0.0
  %vm240 = vcmp.gt.f32.partialorder %v232, 0.0
  %vm241 = vcmp.gt.f32.partialorder %v233, 0.0
  %vm242 = vcmp.gt.f32.partialorder %v234, 0.0
  %v243 = vmul.f32 %v227, 0.2
  %v244 = vmul.f32 %v228, 0.2
  %v245 = vmul.f32 %v229, 0.2
  %v246 = vmul.f32 %v230, 0.2
  %v247 = vmul.f32 %v231, 0.2
  %v248 = vmul.f32 %v232, 0.2
  %v249 = vmul.f32 %v233, 0.2
  %v250 = vmul.f32 %v234, 0.2
  %v251 = vsel %vm235, %v227, %v243
  %v252 = vsel %vm236, %v228, %v244
  %v253 = vsel %vm237, %v229, %v245
  %v254 = vsel %vm238, %v230, %v246
  %v255 = vsel %vm239, %v231, %v247
  %v256 = vsel %vm240, %v232, %v248
  %v257 = vsel %vm241, %v233, %v249
  %v258 = vsel %vm242, %v234, %v250
  %v259 = vadd.f32 %v251, %v34
  %v260 = vadd.f32 %v252, %v35
  %v261 = vadd.f32 %v253, %v36
  %v262 = vadd.f32 %v254, %v37
  %v263 = vadd.f32 %v255, %v38
  %v264 = vadd.f32 %v256, %v39
  %v265 = vadd.f32 %v257, %v40
  %v266 = vadd.f32 %v258, %v41
  %vm267 = vcmask 523264
  %v268 = vsel %vm267, %v259, -inf
  %269 = vmax.xlane.f32.xlu0 %v268
  %v270 = vpop.xlane.xlu0 %269
  %v271 = vsel %vm267, %v260, -inf
  %272 = vmax.xlane.f32.xlu0 %v271
  %v273 = vpop.xlane.xlu0 %272
  %v274 = vsel %vm267, %v261, -inf
  %275 = vmax.xlane.f32.xlu0 %v274
  %v276 = vpop.xlane.xlu0 %275
  %v277 = vsel %vm267, %v262, -inf
  %278 = vmax.xlane.f32.xlu0 %v277
  %v279 = vpop.xlane.xlu0 %278
  %v280 = vsel %vm267, %v263, -inf
  %281 = vmax.xlane.f32.xlu0 %v280
  %v282 = vpop.xlane.xlu0 %281
  %v283 = vsel %vm267, %v264, -inf
  %284 = vmax.xlane.f32.xlu0 %v283
  %v285 = vpop.xlane.xlu0 %284
  %v286 = vsel %vm267, %v265, -inf
  %287 = vmax.xlane.f32.xlu0 %v286
  %v288 = vpop.xlane.xlu0 %287
  %v289 = vsel %vm267, %v266, -inf
  %290 = vmax.xlane.f32.xlu0 %v289
  %v291 = vpop.xlane.xlu0 %290
  %v292 = vsub.f32 %v259, %v270
  %v293 = vsub.f32 %v260, %v273
  %v294 = vsub.f32 %v261, %v276
  %v295 = vsub.f32 %v262, %v279
  %v296 = vsub.f32 %v263, %v282
  %v297 = vsub.f32 %v264, %v285
  %v298 = vsub.f32 %v265, %v288
  %v299 = vsub.f32 %v266, %v291
  %v300 = vmul.f32 %v292, 1.442695
  %v301 = vpow.pop %v300
  %v302 = vmul.f32 %v293, 1.442695
  %v303 = vpow.pop %v302
  %v304 = vmul.f32 %v294, 1.442695
  %v305 = vpow.pop %v304
  %v306 = vmul.f32 %v295, 1.442695
  %v307 = vpow.pop %v306
  %v308 = vmul.f32 %v296, 1.442695
  %v309 = vpow.pop %v308
  %v310 = vmul.f32 %v297, 1.442695
  %v311 = vpow.pop %v310
  %v312 = vmul.f32 %v298, 1.442695
  %v313 = vpow.pop %v312
  %v314 = vmul.f32 %v299, 1.442695
  %v315 = vpow.pop %v314
  %v316 = vsel %vm267, %v301, 0.0
  %317 = vadd.xlane.f32.xlu0 %v316
  %v318 = vpop.xlane.xlu0 %317
  %v319 = vsel %vm267, %v303, 0.0
  %320 = vadd.xlane.f32.xlu0 %v319
  %v321 = vpop.xlane.xlu0 %320
  %v322 = vsel %vm267, %v305, 0.0
  %323 = vadd.xlane.f32.xlu0 %v322
  %v324 = vpop.xlane.xlu0 %323
  %v325 = vsel %vm267, %v307, 0.0
  %326 = vadd.xlane.f32.xlu0 %v325
  %v327 = vpop.xlane.xlu0 %326
  %v328 = vsel %vm267, %v309, 0.0
  %329 = vadd.xlane.f32.xlu0 %v328
  %v330 = vpop.xlane.xlu0 %329
  %v331 = vsel %vm267, %v311, 0.0
  %332 = vadd.xlane.f32.xlu0 %v331
  %v333 = vpop.xlane.xlu0 %332
  %v334 = vsel %vm267, %v313, 0.0
  %335 = vadd.xlane.f32.xlu0 %v334
  %v336 = vpop.xlane.xlu0 %335
  %v337 = vsel %vm267, %v315, 0.0
  %338 = vadd.xlane.f32.xlu0 %v337
  %v339 = vpop.xlane.xlu0 %338
  %v340 = vrcp.pop %v318
  %v341 = vrcp.pop %v321
  %v342 = vrcp.pop %v324
  %v343 = vrcp.pop %v327
  %v344 = vrcp.pop %v330
  %v345 = vrcp.pop %v333
  %v346 = vrcp.pop %v336
  %v347 = vrcp.pop %v339
  %v348 = vmul.f32 %v301, %v340
  %v349 = vmul.f32 %v303, %v341
  %v350 = vmul.f32 %v305, %v342
  %v351 = vmul.f32 %v307, %v343
  %v352 = vmul.f32 %v309, %v344
  %v353 = vmul.f32 %v311, %v345
  %v354 = vmul.f32 %v313, %v346
  %v355 = vmul.f32 %v315, %v347
  %v356 = vpack.c.bf16 %v349, %v348
  %v357 = vpack.c.bf16 %v351, %v350
  %v358 = vpack.c.bf16 %v353, %v352
  %v359 = vpack.c.bf16 %v355, %v354
  %v360 = vpack.c.bf16 %v111, %v108
  %v361 = vpack.c.bf16 %v119, %v116
  %v362 = vpack.c.bf16 %v127, %v124
  %v363 = vpack.c.bf16 %v135, %v132
  %364 = vset.pattern.permute.xlu0 65
  %365 = vperm.xlu0 %364, %v108
  %v366 = vpop.permute.xlu0 %365
  %368 = vset.pattern.permute.xlu0 65
  %369 = vperm.xlu0 %368, %v111
  %v370 = vpop.permute.xlu0 %369
  %372 = vset.pattern.permute.xlu0 65
  %373 = vperm.xlu0 %372, %v116
  %v374 = vpop.permute.xlu0 %373
  %376 = vset.pattern.permute.xlu0 65
  %377 = vperm.xlu0 %376, %v119
  %v378 = vpop.permute.xlu0 %377
  %380 = vset.pattern.permute.xlu0 65
  %381 = vperm.xlu0 %380, %v124
  %v382 = vpop.permute.xlu0 %381
  %384 = vset.pattern.permute.xlu0 65
  %385 = vperm.xlu0 %384, %v127
  %v386 = vpop.permute.xlu0 %385
  %388 = vset.pattern.permute.xlu0 65
  %389 = vperm.xlu0 %388, %v132
  %v390 = vpop.permute.xlu0 %389
  %392 = vset.pattern.permute.xlu0 65
  %393 = vperm.xlu0 %392, %v135
  %v394 = vpop.permute.xlu0 %393
  %v396 = vlaneseq
  %v397 = vshrl.u32 %v396, 7
  %v398 = vsub.s32 1, %v397
  %v399 = vrot.slane %v178, %v398
  %v400 = vadd.f32 %v366, %v399
  %v401 = vadd.f32 %v370, %v399
  %v402 = vadd.f32 %v374, %v399
  %v403 = vadd.f32 %v378, %v399
  %v404 = vadd.f32 %v382, %v399
  %v405 = vadd.f32 %v386, %v399
  %v406 = vadd.f32 %v390, %v399
  %v407 = vadd.f32 %v394, %v399
  %vm408 = vcmp.gt.f32.partialorder %v400, 0.0
  %vm409 = vcmp.gt.f32.partialorder %v401, 0.0
  %vm410 = vcmp.gt.f32.partialorder %v402, 0.0
  %vm411 = vcmp.gt.f32.partialorder %v403, 0.0
  %vm412 = vcmp.gt.f32.partialorder %v404, 0.0
  %vm413 = vcmp.gt.f32.partialorder %v405, 0.0
  %vm414 = vcmp.gt.f32.partialorder %v406, 0.0
  %vm415 = vcmp.gt.f32.partialorder %v407, 0.0
  %v416 = vmul.f32 %v400, 0.2
  %v417 = vmul.f32 %v401, 0.2
  %v418 = vmul.f32 %v402, 0.2
  %v419 = vmul.f32 %v403, 0.2
  %v420 = vmul.f32 %v404, 0.2
  %v421 = vmul.f32 %v405, 0.2
  %v422 = vmul.f32 %v406, 0.2
  %v423 = vmul.f32 %v407, 0.2
  %v424 = vsel %vm408, %v400, %v416
  %v425 = vsel %vm409, %v401, %v417
  %v426 = vsel %vm410, %v402, %v418
  %v427 = vsel %vm411, %v403, %v419
  %v428 = vsel %vm412, %v404, %v420
  %v429 = vsel %vm413, %v405, %v421
  %v430 = vsel %vm414, %v406, %v422
  %v431 = vsel %vm415, %v407, %v423
  %v432 = vadd.f32 %v424, %v34
  %v433 = vadd.f32 %v425, %v35
  %v434 = vadd.f32 %v426, %v36
  %v435 = vadd.f32 %v427, %v37
  %v436 = vadd.f32 %v428, %v38
  %v437 = vadd.f32 %v429, %v39
  %v438 = vadd.f32 %v430, %v40
  %v439 = vadd.f32 %v431, %v41
  %v440 = vsel %vm267, %v432, -inf
  %441 = vmax.xlane.f32.xlu0 %v440
  %v442 = vpop.xlane.xlu0 %441
  %v443 = vsel %vm267, %v433, -inf
  %444 = vmax.xlane.f32.xlu0 %v443
  %v445 = vpop.xlane.xlu0 %444
  %v446 = vsel %vm267, %v434, -inf
  %447 = vmax.xlane.f32.xlu0 %v446
  %v448 = vpop.xlane.xlu0 %447
  %v449 = vsel %vm267, %v435, -inf
  %450 = vmax.xlane.f32.xlu0 %v449
  %v451 = vpop.xlane.xlu0 %450
  %v452 = vsel %vm267, %v436, -inf
  %453 = vmax.xlane.f32.xlu0 %v452
  %v454 = vpop.xlane.xlu0 %453
  %v455 = vsel %vm267, %v437, -inf
  %456 = vmax.xlane.f32.xlu0 %v455
  %v457 = vpop.xlane.xlu0 %456
  %v458 = vsel %vm267, %v438, -inf
  %459 = vmax.xlane.f32.xlu0 %v458
  %v460 = vpop.xlane.xlu0 %459
  %v461 = vsel %vm267, %v439, -inf
  %462 = vmax.xlane.f32.xlu0 %v461
  %v463 = vpop.xlane.xlu0 %462
  %v464 = vsub.f32 %v432, %v442
  %v465 = vsub.f32 %v433, %v445
  %v466 = vsub.f32 %v434, %v448
  %v467 = vsub.f32 %v435, %v451
  %v468 = vsub.f32 %v436, %v454
  %v469 = vsub.f32 %v437, %v457
  %v470 = vsub.f32 %v438, %v460
  %v471 = vsub.f32 %v439, %v463
  %v472 = vmul.f32 %v464, 1.442695
  %v473 = vpow.pop %v472
  %v474 = vmul.f32 %v465, 1.442695
  %v475 = vpow.pop %v474
  %v476 = vmul.f32 %v466, 1.442695
  %v477 = vpow.pop %v476
  %v478 = vmul.f32 %v467, 1.442695
  %v479 = vpow.pop %v478
  %v480 = vmul.f32 %v468, 1.442695
  %v481 = vpow.pop %v480
  %v482 = vmul.f32 %v469, 1.442695
  %v483 = vpow.pop %v482
  %v484 = vmul.f32 %v470, 1.442695
  %v485 = vpow.pop %v484
  %v486 = vmul.f32 %v471, 1.442695
  %v487 = vpow.pop %v486
  %v488 = vsel %vm267, %v473, 0.0
  %489 = vadd.xlane.f32.xlu0 %v488
  %v490 = vpop.xlane.xlu0 %489
  %v491 = vsel %vm267, %v475, 0.0
  %492 = vadd.xlane.f32.xlu0 %v491
  %v493 = vpop.xlane.xlu0 %492
  %v494 = vsel %vm267, %v477, 0.0
  %495 = vadd.xlane.f32.xlu0 %v494
  %v496 = vpop.xlane.xlu0 %495
  %v497 = vsel %vm267, %v479, 0.0
  %498 = vadd.xlane.f32.xlu0 %v497
  %v499 = vpop.xlane.xlu0 %498
  %v500 = vsel %vm267, %v481, 0.0
  %501 = vadd.xlane.f32.xlu0 %v500
  %v502 = vpop.xlane.xlu0 %501
  %v503 = vsel %vm267, %v483, 0.0
  %504 = vadd.xlane.f32.xlu0 %v503
  %v505 = vpop.xlane.xlu0 %504
  %v506 = vsel %vm267, %v485, 0.0
  %507 = vadd.xlane.f32.xlu0 %v506
  %v508 = vpop.xlane.xlu0 %507
  %v509 = vsel %vm267, %v487, 0.0
  %510 = vadd.xlane.f32.xlu0 %v509
  %v511 = vpop.xlane.xlu0 %510
  %v512 = vrcp.pop %v490
  %v513 = vrcp.pop %v493
  %v514 = vrcp.pop %v496
  %v515 = vrcp.pop %v499
  %v516 = vrcp.pop %v502
  %v517 = vrcp.pop %v505
  %v518 = vrcp.pop %v508
  %v519 = vrcp.pop %v511
  %v520 = vmul.f32 %v473, %v512
  %v521 = vmul.f32 %v475, %v513
  %v522 = vmul.f32 %v477, %v514
  %v523 = vmul.f32 %v479, %v515
  %v524 = vmul.f32 %v481, %v516
  %v525 = vmul.f32 %v483, %v517
  %v526 = vmul.f32 %v485, %v518
  %v527 = vmul.f32 %v487, %v519
  %v528 = vpack.c.bf16 %v521, %v520
  %v529 = vpack.c.bf16 %v523, %v522
  %v530 = vpack.c.bf16 %v525, %v524
  %v531 = vpack.c.bf16 %v527, %v526
  %536 = vrot.lane.b32.xlu0 %v360, 96
  %v537 = vpop.permute.xlu0 %536
  %538 = vrot.lane.b32.xlu0 %v361, 96
  %v539 = vpop.permute.xlu0 %538
  %540 = vrot.lane.b32.xlu0 %v362, 96
  %v541 = vpop.permute.xlu0 %540
  %542 = vrot.lane.b32.xlu0 %v363, 96
  %v543 = vpop.permute.xlu0 %542
  %v549 = vsel %vm267, %v528, 0
  %v552 = vsel %vm267, %v529, 0
  %v555 = vsel %vm267, %v530, 0
  %v558 = vsel %vm267, %v531, 0
  %560 = vmatprep.subr.bf16.mxu0 0
  %561 = vmatpush1.bf16.msra.mxu0 0
  %562 = vmatprep.subr.bf16.mxu0 0
  %563 = vmatpush1.bf16.msra.mxu0 0
  %564 = vmatprep.subr.bf16.mxu0 0
  %565 = vmatpush1.bf16.msra.mxu0 0
  %566 = vmatprep.subr.bf16.mxu0 0
  %567 = vmatpush1.bf16.msra.mxu0 0
  %568 = vmatprep.subr.bf16.mxu0 0
  %569 = vmatpush1.bf16.msra.mxu0 %v543
  %570 = vmatprep.subr.bf16.mxu0 0
  %571 = vmatpush1.bf16.msra.mxu0 %v541
  %572 = vmatprep.subr.bf16.mxu0 0
  %573 = vmatpush1.bf16.msra.mxu0 %v539
  %574 = vmatprep.subr.bf16.mxu0 0
  %575 = vmatpush1.bf16.msra.mxu0 %v537
  %576 = vmatprep.subr.bf16.mxu0 0
  %577 = vmatpush2.bf16.msra.mxu0 0
  %578 = vmatprep.subr.bf16.mxu0 0
  %579 = vmatpush2.bf16.msra.mxu0 0
  %580 = vmatprep.subr.bf16.mxu0 0
  %581 = vmatpush2.bf16.msra.mxu0 0
  %582 = vmatprep.subr.bf16.mxu0 0
  %583 = vmatpush2.bf16.msra.mxu0 0
  %584 = vmatprep.subr.bf16.mxu0 0
  %585 = vmatpush2.bf16.msra.mxu0 0
  %586 = vmatprep.subr.bf16.mxu0 0
  %587 = vmatpush2.bf16.msra.mxu0 0
  %588 = vmatprep.subr.bf16.mxu0 0
  %589 = vmatpush2.bf16.msra.mxu0 0
  %590 = vmatprep.subr.bf16.mxu0 0
  %591 = vmatpush2.bf16.msra.mxu0 0
  %592 = vmatprep.mubr.bf16.mxu0 0
  %593 = vmatmul.mubr.bf16.gmra.mxu0 %v549
  %v594 = vpop.f32.mrf.mxu0
  %v595 = vadd.f32 0.0, %v594
  %v596 = vpop.f32.mrf.mxu0
  %v597 = vpop.f32.mrf.mxu0
  %v598 = vadd.f32 0.0, %v597
  %v599 = vpop.f32.mrf.mxu0
  %600 = vmatprep.mubr.bf16.mxu0 0
  %601 = vmatmul.mubr.bf16.gmra.mxu0 %v552
  %v602 = vpop.f32.mrf.mxu0
  %v603 = vadd.f32 0.0, %v602
  %v604 = vpop.f32.mrf.mxu0
  %v605 = vpop.f32.mrf.mxu0
  %v606 = vadd.f32 0.0, %v605
  %v607 = vpop.f32.mrf.mxu0
  %608 = vmatprep.mubr.bf16.mxu0 0
  %609 = vmatmul.mubr.bf16.gmra.mxu0 %v555
  %v610 = vpop.f32.mrf.mxu0
  %v611 = vadd.f32 0.0, %v610
  %v612 = vpop.f32.mrf.mxu0
  %v613 = vpop.f32.mrf.mxu0
  %v614 = vadd.f32 0.0, %v613
  %v615 = vpop.f32.mrf.mxu0
  %616 = vmatprep.mubr.bf16.mxu0 0
  %617 = vmatmul.mubr.bf16.gmra.mxu0 %v558
  %v618 = vpop.f32.mrf.mxu0
  %v619 = vadd.f32 0.0, %v618
  %v620 = vpop.f32.mrf.mxu0
  %v621 = vpop.f32.mrf.mxu0
  %v622 = vadd.f32 0.0, %v621
  %v623 = vpop.f32.mrf.mxu0
  %624 = vdwg.mxu0
  %v626 = vsel %vm267, %v356, 0
  %v629 = vsel %vm267, %v357, 0
  %v632 = vsel %vm267, %v358, 0
  %v635 = vsel %vm267, %v359, 0
  %637 = vmatprep.subr.bf16.mxu0 0
  %638 = vmatpush1.bf16.msra.mxu0 0
  %639 = vmatprep.subr.bf16.mxu0 0
  %640 = vmatpush1.bf16.msra.mxu0 0
  %641 = vmatprep.subr.bf16.mxu0 0
  %642 = vmatpush1.bf16.msra.mxu0 0
  %643 = vmatprep.subr.bf16.mxu0 0
  %644 = vmatpush1.bf16.msra.mxu0 0
  %645 = vmatprep.subr.bf16.mxu0 0
  %646 = vmatpush1.bf16.msra.mxu0 %v363
  %647 = vmatprep.subr.bf16.mxu0 0
  %648 = vmatpush1.bf16.msra.mxu0 %v362
  %649 = vmatprep.subr.bf16.mxu0 0
  %650 = vmatpush1.bf16.msra.mxu0 %v361
  %651 = vmatprep.subr.bf16.mxu0 0
  %652 = vmatpush1.bf16.msra.mxu0 %v360
  %653 = vmatprep.subr.bf16.mxu0 0
  %654 = vmatpush2.bf16.msra.mxu0 0
  %655 = vmatprep.subr.bf16.mxu0 0
  %656 = vmatpush2.bf16.msra.mxu0 0
  %657 = vmatprep.subr.bf16.mxu0 0
  %658 = vmatpush2.bf16.msra.mxu0 0
  %659 = vmatprep.subr.bf16.mxu0 0
  %660 = vmatpush2.bf16.msra.mxu0 0
  %661 = vmatprep.subr.bf16.mxu0 0
  %662 = vmatpush2.bf16.msra.mxu0 0
  %663 = vmatprep.subr.bf16.mxu0 0
  %664 = vmatpush2.bf16.msra.mxu0 0
  %665 = vmatprep.subr.bf16.mxu0 0
  %666 = vmatpush2.bf16.msra.mxu0 0
  %667 = vmatprep.subr.bf16.mxu0 0
  %668 = vmatpush2.bf16.msra.mxu0 0
  %669 = vmatprep.mubr.bf16.mxu0 0
  %670 = vmatmul.mubr.bf16.gmra.mxu0 %v626
  %v671 = vpop.f32.mrf.mxu0
  %v672 = vadd.f32 %v595, %v671
  %v673 = vpop.f32.mrf.mxu0
  %v674 = vpop.f32.mrf.mxu0
  %v675 = vadd.f32 %v598, %v674
  %v676 = vpop.f32.mrf.mxu0
  %677 = vmatprep.mubr.bf16.mxu0 0
  %678 = vmatmul.mubr.bf16.gmra.mxu0 %v629
  %v679 = vpop.f32.mrf.mxu0
  %v680 = vadd.f32 %v603, %v679
  %v681 = vpop.f32.mrf.mxu0
  %v682 = vpop.f32.mrf.mxu0
  %v683 = vadd.f32 %v606, %v682
  %v684 = vpop.f32.mrf.mxu0
  %685 = vmatprep.mubr.bf16.mxu0 0
  %686 = vmatmul.mubr.bf16.gmra.mxu0 %v632
  %v687 = vpop.f32.mrf.mxu0
  %v688 = vadd.f32 %v611, %v687
  %v689 = vpop.f32.mrf.mxu0
  %v690 = vpop.f32.mrf.mxu0
  %v691 = vadd.f32 %v614, %v690
  %v692 = vpop.f32.mrf.mxu0
  %693 = vmatprep.mubr.bf16.mxu0 0
  %694 = vmatmul.mubr.bf16.gmra.mxu0 %v635
  %v695 = vpop.f32.mrf.mxu0
  %v696 = vadd.f32 %v619, %v695
  %v697 = vpop.f32.mrf.mxu0
  %v698 = vpop.f32.mrf.mxu0
  %v699 = vadd.f32 %v622, %v698
  %v700 = vpop.f32.mrf.mxu0
  %701 = vdwg.mxu0
  %v702 = vlaneseq
  %v703 = vshrl.u32 %v702, 7
  %v704 = vsub.s32 6, %v703
  %v705 = vrot.slane %v50, %v704
  %v706 = vadd.f32 %v672, %v705
  %v707 = vadd.f32 %v675, %v705
  %v708 = vadd.f32 %v680, %v705
  %v709 = vadd.f32 %v683, %v705
  %v710 = vadd.f32 %v688, %v705
  %v711 = vadd.f32 %v691, %v705
  %v712 = vadd.f32 %v696, %v705
  %v713 = vadd.f32 %v699, %v705
  %v714 = vmax.f32 %v706, 0.0
  %v715 = vmax.f32 %v707, 0.0
  %v716 = vmax.f32 %v708, 0.0
  %v717 = vmax.f32 %v709, 0.0
  %v718 = vmax.f32 %v710, 0.0
  %v719 = vmax.f32 %v711, 0.0
  %v720 = vmax.f32 %v712, 0.0
  %v721 = vmax.f32 %v713, 0.0
  %v722 = vld [vmem:[%s3] sm:$0xff]
  %v723 = vld [vmem:[%s3 + $0x8] sm:$0xff]
  %v724 = vld [vmem:[%s3 + $0x10] sm:$0xff]
  %v725 = vld [vmem:[%s3 + $0x18] sm:$0xff]
  %v726 = vld [vmem:[%s3 + $0x20] sm:$0x7]
  %v727 = vpack.c.bf16 %v715, %v714
  %v728 = vpack.c.bf16 %v717, %v716
  %v729 = vpack.c.bf16 %v719, %v718
  %v730 = vpack.c.bf16 %v721, %v720
  %v731 = vpack.c.bf16 %v723, %v722
  %v732 = vpack.c.bf16 %v725, %v724
  %vm733 = vcmask 261120
  %v735 = vsel %vm733, %v727, 0
  %v738 = vsel %vm733, %v728, 0
  %v741 = vsel %vm733, %v729, 0
  %v744 = vsel %vm733, %v730, 0
  %746 = vmatprep.subr.bf16.mxu0 0
  %747 = vmatpush1.bf16.msra.mxu0 0
  %748 = vmatprep.subr.bf16.mxu0 0
  %749 = vmatpush1.bf16.msra.mxu0 0
  %750 = vmatprep.subr.bf16.mxu0 0
  %751 = vmatpush1.bf16.msra.mxu0 0
  %752 = vmatprep.subr.bf16.mxu0 0
  %753 = vmatpush1.bf16.msra.mxu0 0
  %754 = vmatprep.subr.bf16.mxu0 0
  %755 = vmatpush1.bf16.msra.mxu0 0
  %756 = vmatprep.subr.bf16.mxu0 0
  %757 = vmatpush1.bf16.msra.mxu0 0
  %758 = vmatprep.subr.bf16.mxu0 0
  %759 = vmatpush1.bf16.msra.mxu0 %v732
  %760 = vmatprep.subr.bf16.mxu0 0
  %761 = vmatpush1.bf16.msra.mxu0 %v731
  %762 = vmatprep.subr.bf16.mxu0 0
  %763 = vmatpush2.bf16.msra.mxu0 0
  %764 = vmatprep.subr.bf16.mxu0 0
  %765 = vmatpush2.bf16.msra.mxu0 0
  %766 = vmatprep.subr.bf16.mxu0 0
  %767 = vmatpush2.bf16.msra.mxu0 0
  %768 = vmatprep.subr.bf16.mxu0 0
  %769 = vmatpush2.bf16.msra.mxu0 0
  %770 = vmatprep.subr.bf16.mxu0 0
  %771 = vmatpush2.bf16.msra.mxu0 0
  %772 = vmatprep.subr.bf16.mxu0 0
  %773 = vmatpush2.bf16.msra.mxu0 0
  %774 = vmatprep.subr.bf16.mxu0 0
  %775 = vmatpush2.bf16.msra.mxu0 0
  %776 = vmatprep.subr.bf16.mxu0 0
  %777 = vmatpush2.bf16.msra.mxu0 0
  %778 = vmatprep.mubr.bf16.mxu0 0
  %779 = vmatmul.mubr.bf16.gmra.mxu0 %v735
  %v780 = vpop.f32.mrf.mxu0
  %v781 = vadd.f32 0.0, %v780
  %v782 = vpop.f32.mrf.mxu0
  %v783 = vpop.f32.mrf.mxu0
  %v784 = vadd.f32 0.0, %v783
  %v785 = vpop.f32.mrf.mxu0
  %786 = vmatprep.mubr.bf16.mxu0 0
  %787 = vmatmul.mubr.bf16.gmra.mxu0 %v738
  %v788 = vpop.f32.mrf.mxu0
  %v789 = vadd.f32 0.0, %v788
  %v790 = vpop.f32.mrf.mxu0
  %v791 = vpop.f32.mrf.mxu0
  %v792 = vadd.f32 0.0, %v791
  %v793 = vpop.f32.mrf.mxu0
  %794 = vmatprep.mubr.bf16.mxu0 0
  %795 = vmatmul.mubr.bf16.gmra.mxu0 %v741
  %v796 = vpop.f32.mrf.mxu0
  %v797 = vadd.f32 0.0, %v796
  %v798 = vpop.f32.mrf.mxu0
  %v799 = vpop.f32.mrf.mxu0
  %v800 = vadd.f32 0.0, %v799
  %v801 = vpop.f32.mrf.mxu0
  %802 = vmatprep.mubr.bf16.mxu0 0
  %803 = vmatmul.mubr.bf16.gmra.mxu0 %v744
  %v804 = vpop.f32.mrf.mxu0
  %v805 = vadd.f32 0.0, %v804
  %v806 = vpop.f32.mrf.mxu0
  %v807 = vpop.f32.mrf.mxu0
  %v808 = vadd.f32 0.0, %v807
  %v809 = vpop.f32.mrf.mxu0
  %810 = vdwg.mxu0
  %v811 = vpack.c.bf16 %v726, %v726
  %v813 = vsel %vm733, %v811, 0
  %815 = vmatprep.subr.bf16.mxu0 0
  %816 = vmatpush1.bf16.xpose.msra.mxu0 0
  %817 = vmatprep.subr.bf16.mxu0 0
  %818 = vmatpush1.bf16.xpose.msra.mxu0 0
  %819 = vmatprep.subr.bf16.mxu0 0
  %820 = vmatpush1.bf16.xpose.msra.mxu0 0
  %821 = vmatprep.subr.bf16.mxu0 0
  %822 = vmatpush1.bf16.xpose.msra.mxu0 0
  %823 = vmatprep.subr.bf16.mxu0 0
  %824 = vmatpush1.bf16.xpose.msra.mxu0 %v744
  %825 = vmatprep.subr.bf16.mxu0 0
  %826 = vmatpush1.bf16.xpose.msra.mxu0 %v741
  %827 = vmatprep.subr.bf16.mxu0 0
  %828 = vmatpush1.bf16.xpose.msra.mxu0 %v738
  %829 = vmatprep.subr.bf16.mxu0 0
  %830 = vmatpush1.bf16.xpose.msra.mxu0 %v735
  %831 = vmatprep.subr.bf16.mxu0 0
  %832 = vmatpush2.bf16.xpose.msra.mxu0 0
  %833 = vmatprep.subr.bf16.mxu0 0
  %834 = vmatpush2.bf16.xpose.msra.mxu0 0
  %835 = vmatprep.subr.bf16.mxu0 0
  %836 = vmatpush2.bf16.xpose.msra.mxu0 0
  %837 = vmatprep.subr.bf16.mxu0 0
  %838 = vmatpush2.bf16.xpose.msra.mxu0 0
  %839 = vmatprep.subr.bf16.mxu0 0
  %840 = vmatpush2.bf16.xpose.msra.mxu0 0
  %841 = vmatprep.subr.bf16.mxu0 0
  %842 = vmatpush2.bf16.xpose.msra.mxu0 0
  %843 = vmatprep.subr.bf16.mxu0 0
  %844 = vmatpush2.bf16.xpose.msra.mxu0 0
  %845 = vmatprep.subr.bf16.mxu0 0
  %846 = vmatpush2.bf16.xpose.msra.mxu0 0
  %847 = vmatprep.mubr.bf16.mxu0 0
  %848 = vmatmul.mubr.bf16.gmra.mxu0 %v813
  %v849 = vpop.f32.mrf.mxu0
  %v850 = vadd.f32 0.0, %v849
  %v851 = vpop.f32.mrf.mxu0
  %v852 = vpop.f32.mrf.mxu0
  %v853 = vpop.f32.mrf.mxu0
  %854 = vdwg.mxu0
  %856 = vset.pattern.permute.xlu0 8
  %857 = vperm.xlu0 %856, %v781
  %v858 = vpop.permute.xlu0 %857
  %861 = vset.pattern.permute.xlu0 8
  %862 = vperm.xlu0 %861, %v784
  %v863 = vpop.permute.xlu0 %862
  %866 = vset.pattern.permute.xlu0 8
  %867 = vperm.xlu0 %866, %v789
  %v868 = vpop.permute.xlu0 %867
  %871 = vset.pattern.permute.xlu0 8
  %872 = vperm.xlu0 %871, %v792
  %v873 = vpop.permute.xlu0 %872
  %876 = vset.pattern.permute.xlu0 8
  %877 = vperm.xlu0 %876, %v797
  %v878 = vpop.permute.xlu0 %877
  %881 = vset.pattern.permute.xlu0 8
  %882 = vperm.xlu0 %881, %v800
  %v883 = vpop.permute.xlu0 %882
  %886 = vset.pattern.permute.xlu0 8
  %887 = vperm.xlu0 %886, %v805
  %v888 = vpop.permute.xlu0 %887
  %891 = vset.pattern.permute.xlu0 8
  %892 = vperm.xlu0 %891, %v808
  %v893 = vpop.permute.xlu0 %892
  %v895 = vlaneseq
  %v896 = vshrl.u32 %v895, 7
  %v897 = vsub.s32 0, %v896
  %v898 = vrot.slane %v850, %v897
  %v899 = vadd.f32 %v858, %v898
  %v900 = vadd.f32 %v863, %v898
  %v901 = vadd.f32 %v868, %v898
  %v902 = vadd.f32 %v873, %v898
  %v903 = vadd.f32 %v878, %v898
  %v904 = vadd.f32 %v883, %v898
  %v905 = vadd.f32 %v888, %v898
  %v906 = vadd.f32 %v893, %v898
  %vm907 = vcmp.gt.f32.partialorder %v899, 0.0
  %vm908 = vcmp.gt.f32.partialorder %v900, 0.0
  %vm909 = vcmp.gt.f32.partialorder %v901, 0.0
  %vm910 = vcmp.gt.f32.partialorder %v902, 0.0
  %vm911 = vcmp.gt.f32.partialorder %v903, 0.0
  %vm912 = vcmp.gt.f32.partialorder %v904, 0.0
  %vm913 = vcmp.gt.f32.partialorder %v905, 0.0
  %vm914 = vcmp.gt.f32.partialorder %v906, 0.0
  %v915 = vmul.f32 %v899, 0.2
  %v916 = vmul.f32 %v900, 0.2
  %v917 = vmul.f32 %v901, 0.2
  %v918 = vmul.f32 %v902, 0.2
  %v919 = vmul.f32 %v903, 0.2
  %v920 = vmul.f32 %v904, 0.2
  %v921 = vmul.f32 %v905, 0.2
  %v922 = vmul.f32 %v906, 0.2
  %v923 = vsel %vm907, %v899, %v915
  %v924 = vsel %vm908, %v900, %v916
  %v925 = vsel %vm909, %v901, %v917
  %v926 = vsel %vm910, %v902, %v918
  %v927 = vsel %vm911, %v903, %v919
  %v928 = vsel %vm912, %v904, %v920
  %v929 = vsel %vm913, %v905, %v921
  %v930 = vsel %vm914, %v906, %v922
  %v931 = vadd.f32 %v923, %v34
  %v932 = vadd.f32 %v924, %v35
  %v933 = vadd.f32 %v925, %v36
  %v934 = vadd.f32 %v926, %v37
  %v935 = vadd.f32 %v927, %v38
  %v936 = vadd.f32 %v928, %v39
  %v937 = vadd.f32 %v929, %v40
  %v938 = vadd.f32 %v930, %v41
  %v939 = vsel %vm267, %v931, -inf
  %940 = vmax.xlane.f32.xlu0 %v939
  %v941 = vpop.xlane.xlu0 %940
  %v942 = vsel %vm267, %v932, -inf
  %943 = vmax.xlane.f32.xlu0 %v942
  %v944 = vpop.xlane.xlu0 %943
  %v945 = vsel %vm267, %v933, -inf
  %946 = vmax.xlane.f32.xlu0 %v945
  %v947 = vpop.xlane.xlu0 %946
  %v948 = vsel %vm267, %v934, -inf
  %949 = vmax.xlane.f32.xlu0 %v948
  %v950 = vpop.xlane.xlu0 %949
  %v951 = vsel %vm267, %v935, -inf
  %952 = vmax.xlane.f32.xlu0 %v951
  %v953 = vpop.xlane.xlu0 %952
  %v954 = vsel %vm267, %v936, -inf
  %955 = vmax.xlane.f32.xlu0 %v954
  %v956 = vpop.xlane.xlu0 %955
  %v957 = vsel %vm267, %v937, -inf
  %958 = vmax.xlane.f32.xlu0 %v957
  %v959 = vpop.xlane.xlu0 %958
  %v960 = vsel %vm267, %v938, -inf
  %961 = vmax.xlane.f32.xlu0 %v960
  %v962 = vpop.xlane.xlu0 %961
  %v963 = vsub.f32 %v931, %v941
  %v964 = vsub.f32 %v932, %v944
  %v965 = vsub.f32 %v933, %v947
  %v966 = vsub.f32 %v934, %v950
  %v967 = vsub.f32 %v935, %v953
  %v968 = vsub.f32 %v936, %v956
  %v969 = vsub.f32 %v937, %v959
  %v970 = vsub.f32 %v938, %v962
  %v971 = vmul.f32 %v963, 1.442695
  %v972 = vpow.pop %v971
  %v973 = vmul.f32 %v964, 1.442695
  %v974 = vpow.pop %v973
  %v975 = vmul.f32 %v965, 1.442695
  %v976 = vpow.pop %v975
  %v977 = vmul.f32 %v966, 1.442695
  %v978 = vpow.pop %v977
  %v979 = vmul.f32 %v967, 1.442695
  %v980 = vpow.pop %v979
  %v981 = vmul.f32 %v968, 1.442695
  %v982 = vpow.pop %v981
  %v983 = vmul.f32 %v969, 1.442695
  %v984 = vpow.pop %v983
  %v985 = vmul.f32 %v970, 1.442695
  %v986 = vpow.pop %v985
  %v987 = vsel %vm267, %v972, 0.0
  %988 = vadd.xlane.f32.xlu0 %v987
  %v989 = vpop.xlane.xlu0 %988
  %v990 = vsel %vm267, %v974, 0.0
  %991 = vadd.xlane.f32.xlu0 %v990
  %v992 = vpop.xlane.xlu0 %991
  %v993 = vsel %vm267, %v976, 0.0
  %994 = vadd.xlane.f32.xlu0 %v993
  %v995 = vpop.xlane.xlu0 %994
  %v996 = vsel %vm267, %v978, 0.0
  %997 = vadd.xlane.f32.xlu0 %v996
  %v998 = vpop.xlane.xlu0 %997
  %v999 = vsel %vm267, %v980, 0.0
  %1000 = vadd.xlane.f32.xlu0 %v999
  %v1001 = vpop.xlane.xlu0 %1000
  %v1002 = vsel %vm267, %v982, 0.0
  %1003 = vadd.xlane.f32.xlu0 %v1002
  %v1004 = vpop.xlane.xlu0 %1003
  %v1005 = vsel %vm267, %v984, 0.0
  %1006 = vadd.xlane.f32.xlu0 %v1005
  %v1007 = vpop.xlane.xlu0 %1006
  %v1008 = vsel %vm267, %v986, 0.0
  %1009 = vadd.xlane.f32.xlu0 %v1008
  %v1010 = vpop.xlane.xlu0 %1009
  %v1011 = vrcp.pop %v989
  %v1012 = vrcp.pop %v992
  %v1013 = vrcp.pop %v995
  %v1014 = vrcp.pop %v998
  %v1015 = vrcp.pop %v1001
  %v1016 = vrcp.pop %v1004
  %v1017 = vrcp.pop %v1007
  %v1018 = vrcp.pop %v1010
  %v1019 = vmul.f32 %v972, %v1011
  %v1020 = vmul.f32 %v974, %v1012
  %v1021 = vmul.f32 %v976, %v1013
  %v1022 = vmul.f32 %v978, %v1014
  %v1023 = vmul.f32 %v980, %v1015
  %v1024 = vmul.f32 %v982, %v1016
  %v1025 = vmul.f32 %v984, %v1017
  %v1026 = vmul.f32 %v986, %v1018
  %v1027 = vpack.c.bf16 %v1020, %v1019
  %v1028 = vpack.c.bf16 %v1022, %v1021
  %v1029 = vpack.c.bf16 %v1024, %v1023
  %v1030 = vpack.c.bf16 %v1026, %v1025
  %v1031 = vpack.c.bf16 %v784, %v781
  %v1032 = vpack.c.bf16 %v792, %v789
  %v1033 = vpack.c.bf16 %v800, %v797
  %v1034 = vpack.c.bf16 %v808, %v805
  %1035 = vset.pattern.permute.xlu0 9
  %1036 = vperm.xlu0 %1035, %v781
  %v1037 = vpop.permute.xlu0 %1036
  %1039 = vset.pattern.permute.xlu0 9
  %1040 = vperm.xlu0 %1039, %v784
  %v1041 = vpop.permute.xlu0 %1040
  %1043 = vset.pattern.permute.xlu0 9
  %1044 = vperm.xlu0 %1043, %v789
  %v1045 = vpop.permute.xlu0 %1044
  %1047 = vset.pattern.permute.xlu0 9
  %1048 = vperm.xlu0 %1047, %v792
  %v1049 = vpop.permute.xlu0 %1048
  %1051 = vset.pattern.permute.xlu0 9
  %1052 = vperm.xlu0 %1051, %v797
  %v1053 = vpop.permute.xlu0 %1052
  %1055 = vset.pattern.permute.xlu0 9
  %1056 = vperm.xlu0 %1055, %v800
  %v1057 = vpop.permute.xlu0 %1056
  %1059 = vset.pattern.permute.xlu0 9
  %1060 = vperm.xlu0 %1059, %v805
  %v1061 = vpop.permute.xlu0 %1060
  %1063 = vset.pattern.permute.xlu0 9
  %1064 = vperm.xlu0 %1063, %v808
  %v1065 = vpop.permute.xlu0 %1064
  %v1067 = vlaneseq
  %v1068 = vshrl.u32 %v1067, 7
  %v1069 = vsub.s32 1, %v1068
  %v1070 = vrot.slane %v850, %v1069
  %v1071 = vadd.f32 %v1037, %v1070
  %v1072 = vadd.f32 %v1041, %v1070
  %v1073 = vadd.f32 %v1045, %v1070
  %v1074 = vadd.f32 %v1049, %v1070
  %v1075 = vadd.f32 %v1053, %v1070
  %v1076 = vadd.f32 %v1057, %v1070
  %v1077 = vadd.f32 %v1061, %v1070
  %v1078 = vadd.f32 %v1065, %v1070
  %vm1079 = vcmp.gt.f32.partialorder %v1071, 0.0
  %vm1080 = vcmp.gt.f32.partialorder %v1072, 0.0
  %vm1081 = vcmp.gt.f32.partialorder %v1073, 0.0
  %vm1082 = vcmp.gt.f32.partialorder %v1074, 0.0
  %vm1083 = vcmp.gt.f32.partialorder %v1075, 0.0
  %vm1084 = vcmp.gt.f32.partialorder %v1076, 0.0
  %vm1085 = vcmp.gt.f32.partialorder %v1077, 0.0
  %vm1086 = vcmp.gt.f32.partialorder %v1078, 0.0
  %v1087 = vmul.f32 %v1071, 0.2
  %v1088 = vmul.f32 %v1072, 0.2
  %v1089 = vmul.f32 %v1073, 0.2
  %v1090 = vmul.f32 %v1074, 0.2
  %v1091 = vmul.f32 %v1075, 0.2
  %v1092 = vmul.f32 %v1076, 0.2
  %v1093 = vmul.f32 %v1077, 0.2
  %v1094 = vmul.f32 %v1078, 0.2
  %v1095 = vsel %vm1079, %v1071, %v1087
  %v1096 = vsel %vm1080, %v1072, %v1088
  %v1097 = vsel %vm1081, %v1073, %v1089
  %v1098 = vsel %vm1082, %v1074, %v1090
  %v1099 = vsel %vm1083, %v1075, %v1091
  %v1100 = vsel %vm1084, %v1076, %v1092
  %v1101 = vsel %vm1085, %v1077, %v1093
  %v1102 = vsel %vm1086, %v1078, %v1094
  %v1103 = vadd.f32 %v1095, %v34
  %v1104 = vadd.f32 %v1096, %v35
  %v1105 = vadd.f32 %v1097, %v36
  %v1106 = vadd.f32 %v1098, %v37
  %v1107 = vadd.f32 %v1099, %v38
  %v1108 = vadd.f32 %v1100, %v39
  %v1109 = vadd.f32 %v1101, %v40
  %v1110 = vadd.f32 %v1102, %v41
  %v1111 = vsel %vm267, %v1103, -inf
  %1112 = vmax.xlane.f32.xlu0 %v1111
  %v1113 = vpop.xlane.xlu0 %1112
  %v1114 = vsel %vm267, %v1104, -inf
  %1115 = vmax.xlane.f32.xlu0 %v1114
  %v1116 = vpop.xlane.xlu0 %1115
  %v1117 = vsel %vm267, %v1105, -inf
  %1118 = vmax.xlane.f32.xlu0 %v1117
  %v1119 = vpop.xlane.xlu0 %1118
  %v1120 = vsel %vm267, %v1106, -inf
  %1121 = vmax.xlane.f32.xlu0 %v1120
  %v1122 = vpop.xlane.xlu0 %1121
  %v1123 = vsel %vm267, %v1107, -inf
  %1124 = vmax.xlane.f32.xlu0 %v1123
  %v1125 = vpop.xlane.xlu0 %1124
  %v1126 = vsel %vm267, %v1108, -inf
  %1127 = vmax.xlane.f32.xlu0 %v1126
  %v1128 = vpop.xlane.xlu0 %1127
  %v1129 = vsel %vm267, %v1109, -inf
  %1130 = vmax.xlane.f32.xlu0 %v1129
  %v1131 = vpop.xlane.xlu0 %1130
  %v1132 = vsel %vm267, %v1110, -inf
  %1133 = vmax.xlane.f32.xlu0 %v1132
  %v1134 = vpop.xlane.xlu0 %1133
  %v1135 = vsub.f32 %v1103, %v1113
  %v1136 = vsub.f32 %v1104, %v1116
  %v1137 = vsub.f32 %v1105, %v1119
  %v1138 = vsub.f32 %v1106, %v1122
  %v1139 = vsub.f32 %v1107, %v1125
  %v1140 = vsub.f32 %v1108, %v1128
  %v1141 = vsub.f32 %v1109, %v1131
  %v1142 = vsub.f32 %v1110, %v1134
  %v1143 = vmul.f32 %v1135, 1.442695
  %v1144 = vpow.pop %v1143
  %v1145 = vmul.f32 %v1136, 1.442695
  %v1146 = vpow.pop %v1145
  %v1147 = vmul.f32 %v1137, 1.442695
  %v1148 = vpow.pop %v1147
  %v1149 = vmul.f32 %v1138, 1.442695
  %v1150 = vpow.pop %v1149
  %v1151 = vmul.f32 %v1139, 1.442695
  %v1152 = vpow.pop %v1151
  %v1153 = vmul.f32 %v1140, 1.442695
  %v1154 = vpow.pop %v1153
  %v1155 = vmul.f32 %v1141, 1.442695
  %v1156 = vpow.pop %v1155
  %v1157 = vmul.f32 %v1142, 1.442695
  %v1158 = vpow.pop %v1157
  %v1159 = vsel %vm267, %v1144, 0.0
  %1160 = vadd.xlane.f32.xlu0 %v1159
  %v1161 = vpop.xlane.xlu0 %1160
  %v1162 = vsel %vm267, %v1146, 0.0
  %1163 = vadd.xlane.f32.xlu0 %v1162
  %v1164 = vpop.xlane.xlu0 %1163
  %v1165 = vsel %vm267, %v1148, 0.0
  %1166 = vadd.xlane.f32.xlu0 %v1165
  %v1167 = vpop.xlane.xlu0 %1166
  %v1168 = vsel %vm267, %v1150, 0.0
  %1169 = vadd.xlane.f32.xlu0 %v1168
  %v1170 = vpop.xlane.xlu0 %1169
  %v1171 = vsel %vm267, %v1152, 0.0
  %1172 = vadd.xlane.f32.xlu0 %v1171
  %v1173 = vpop.xlane.xlu0 %1172
  %v1174 = vsel %vm267, %v1154, 0.0
  %1175 = vadd.xlane.f32.xlu0 %v1174
  %v1176 = vpop.xlane.xlu0 %1175
  %v1177 = vsel %vm267, %v1156, 0.0
  %1178 = vadd.xlane.f32.xlu0 %v1177
  %v1179 = vpop.xlane.xlu0 %1178
  %v1180 = vsel %vm267, %v1158, 0.0
  %1181 = vadd.xlane.f32.xlu0 %v1180
  %v1182 = vpop.xlane.xlu0 %1181
  %v1183 = vrcp.pop %v1161
  %v1184 = vrcp.pop %v1164
  %v1185 = vrcp.pop %v1167
  %v1186 = vrcp.pop %v1170
  %v1187 = vrcp.pop %v1173
  %v1188 = vrcp.pop %v1176
  %v1189 = vrcp.pop %v1179
  %v1190 = vrcp.pop %v1182
  %v1191 = vmul.f32 %v1144, %v1183
  %v1192 = vmul.f32 %v1146, %v1184
  %v1193 = vmul.f32 %v1148, %v1185
  %v1194 = vmul.f32 %v1150, %v1186
  %v1195 = vmul.f32 %v1152, %v1187
  %v1196 = vmul.f32 %v1154, %v1188
  %v1197 = vmul.f32 %v1156, %v1189
  %v1198 = vmul.f32 %v1158, %v1190
  %v1199 = vpack.c.bf16 %v1192, %v1191
  %v1200 = vpack.c.bf16 %v1194, %v1193
  %v1201 = vpack.c.bf16 %v1196, %v1195
  %v1202 = vpack.c.bf16 %v1198, %v1197
  %1207 = vrot.lane.b32.xlu0 %v1031, 124
  %v1208 = vpop.permute.xlu0 %1207
  %1209 = vrot.lane.b32.xlu0 %v1032, 124
  %v1210 = vpop.permute.xlu0 %1209
  %1211 = vrot.lane.b32.xlu0 %v1033, 124
  %v1212 = vpop.permute.xlu0 %1211
  %1213 = vrot.lane.b32.xlu0 %v1034, 124
  %v1214 = vpop.permute.xlu0 %1213
  %v1220 = vsel %vm267, %v1199, 0
  %v1223 = vsel %vm267, %v1200, 0
  %v1226 = vsel %vm267, %v1201, 0
  %v1229 = vsel %vm267, %v1202, 0
  %1231 = vmatprep.subr.bf16.mxu0 0
  %1232 = vmatpush1.bf16.msra.mxu0 0
  %1233 = vmatprep.subr.bf16.mxu0 0
  %1234 = vmatpush1.bf16.msra.mxu0 0
  %1235 = vmatprep.subr.bf16.mxu0 0
  %1236 = vmatpush1.bf16.msra.mxu0 0
  %1237 = vmatprep.subr.bf16.mxu0 0
  %1238 = vmatpush1.bf16.msra.mxu0 0
  %1239 = vmatprep.subr.bf16.mxu0 0
  %1240 = vmatpush1.bf16.msra.mxu0 %v1214
  %1241 = vmatprep.subr.bf16.mxu0 0
  %1242 = vmatpush1.bf16.msra.mxu0 %v1212
  %1243 = vmatprep.subr.bf16.mxu0 0
  %1244 = vmatpush1.bf16.msra.mxu0 %v1210
  %1245 = vmatprep.subr.bf16.mxu0 0
  %1246 = vmatpush1.bf16.msra.mxu0 %v1208
  %1247 = vmatprep.subr.bf16.mxu0 0
  %1248 = vmatpush2.bf16.msra.mxu0 0
  %1249 = vmatprep.subr.bf16.mxu0 0
  %1250 = vmatpush2.bf16.msra.mxu0 0
  %1251 = vmatprep.subr.bf16.mxu0 0
  %1252 = vmatpush2.bf16.msra.mxu0 0
  %1253 = vmatprep.subr.bf16.mxu0 0
  %1254 = vmatpush2.bf16.msra.mxu0 0
  %1255 = vmatprep.subr.bf16.mxu0 0
  %1256 = vmatpush2.bf16.msra.mxu0 0
  %1257 = vmatprep.subr.bf16.mxu0 0
  %1258 = vmatpush2.bf16.msra.mxu0 0
  %1259 = vmatprep.subr.bf16.mxu0 0
  %1260 = vmatpush2.bf16.msra.mxu0 0
  %1261 = vmatprep.subr.bf16.mxu0 0
  %1262 = vmatpush2.bf16.msra.mxu0 0
  %1263 = vmatprep.mubr.bf16.mxu0 0
  %1264 = vmatmul.mubr.bf16.gmra.mxu0 %v1220
  %v1265 = vpop.f32.mrf.mxu0
  %v1266 = vadd.f32 0.0, %v1265
  %v1267 = vpop.f32.mrf.mxu0
  %v1268 = vpop.f32.mrf.mxu0
  %v1269 = vadd.f32 0.0, %v1268
  %v1270 = vpop.f32.mrf.mxu0
  %1271 = vmatprep.mubr.bf16.mxu0 0
  %1272 = vmatmul.mubr.bf16.gmra.mxu0 %v1223
  %v1273 = vpop.f32.mrf.mxu0
  %v1274 = vadd.f32 0.0, %v1273
  %v1275 = vpop.f32.mrf.mxu0
  %v1276 = vpop.f32.mrf.mxu0
  %v1277 = vadd.f32 0.0, %v1276
  %v1278 = vpop.f32.mrf.mxu0
  %1279 = vmatprep.mubr.bf16.mxu0 0
  %1280 = vmatmul.mubr.bf16.gmra.mxu0 %v1226
  %v1281 = vpop.f32.mrf.mxu0
  %v1282 = vadd.f32 0.0, %v1281
  %v1283 = vpop.f32.mrf.mxu0
  %v1284 = vpop.f32.mrf.mxu0
  %v1285 = vadd.f32 0.0, %v1284
  %v1286 = vpop.f32.mrf.mxu0
  %1287 = vmatprep.mubr.bf16.mxu0 0
  %1288 = vmatmul.mubr.bf16.gmra.mxu0 %v1229
  %v1289 = vpop.f32.mrf.mxu0
  %v1290 = vadd.f32 0.0, %v1289
  %v1291 = vpop.f32.mrf.mxu0
  %v1292 = vpop.f32.mrf.mxu0
  %v1293 = vadd.f32 0.0, %v1292
  %v1294 = vpop.f32.mrf.mxu0
  %1295 = vdwg.mxu0
  %v1297 = vsel %vm267, %v1027, 0
  %v1300 = vsel %vm267, %v1028, 0
  %v1303 = vsel %vm267, %v1029, 0
  %v1306 = vsel %vm267, %v1030, 0
  %1308 = vmatprep.subr.bf16.mxu0 0
  %1309 = vmatpush1.bf16.msra.mxu0 0
  %1310 = vmatprep.subr.bf16.mxu0 0
  %1311 = vmatpush1.bf16.msra.mxu0 0
  %1312 = vmatprep.subr.bf16.mxu0 0
  %1313 = vmatpush1.bf16.msra.mxu0 0
  %1314 = vmatprep.subr.bf16.mxu0 0
  %1315 = vmatpush1.bf16.msra.mxu0 0
  %1316 = vmatprep.subr.bf16.mxu0 0
  %1317 = vmatpush1.bf16.msra.mxu0 %v1034
  %1318 = vmatprep.subr.bf16.mxu0 0
  %1319 = vmatpush1.bf16.msra.mxu0 %v1033
  %1320 = vmatprep.subr.bf16.mxu0 0
  %1321 = vmatpush1.bf16.msra.mxu0 %v1032
  %1322 = vmatprep.subr.bf16.mxu0 0
  %1323 = vmatpush1.bf16.msra.mxu0 %v1031
  %1324 = vmatprep.subr.bf16.mxu0 0
  %1325 = vmatpush2.bf16.msra.mxu0 0
  %1326 = vmatprep.subr.bf16.mxu0 0
  %1327 = vmatpush2.bf16.msra.mxu0 0
  %1328 = vmatprep.subr.bf16.mxu0 0
  %1329 = vmatpush2.bf16.msra.mxu0 0
  %1330 = vmatprep.subr.bf16.mxu0 0
  %1331 = vmatpush2.bf16.msra.mxu0 0
  %1332 = vmatprep.subr.bf16.mxu0 0
  %1333 = vmatpush2.bf16.msra.mxu0 0
  %1334 = vmatprep.subr.bf16.mxu0 0
  %1335 = vmatpush2.bf16.msra.mxu0 0
  %1336 = vmatprep.subr.bf16.mxu0 0
  %1337 = vmatpush2.bf16.msra.mxu0 0
  %1338 = vmatprep.subr.bf16.mxu0 0
  %1339 = vmatpush2.bf16.msra.mxu0 0
  %1340 = vmatprep.mubr.bf16.mxu0 0
  %1341 = vmatmul.mubr.bf16.gmra.mxu0 %v1297
  %v1342 = vpop.f32.mrf.mxu0
  %v1343 = vadd.f32 %v1266, %v1342
  %v1344 = vpop.f32.mrf.mxu0
  %v1345 = vpop.f32.mrf.mxu0
  %v1346 = vadd.f32 %v1269, %v1345
  %v1347 = vpop.f32.mrf.mxu0
  %1348 = vmatprep.mubr.bf16.mxu0 0
  %1349 = vmatmul.mubr.bf16.gmra.mxu0 %v1300
  %v1350 = vpop.f32.mrf.mxu0
  %v1351 = vadd.f32 %v1274, %v1350
  %v1352 = vpop.f32.mrf.mxu0
  %v1353 = vpop.f32.mrf.mxu0
  %v1354 = vadd.f32 %v1277, %v1353
  %v1355 = vpop.f32.mrf.mxu0
  %1356 = vmatprep.mubr.bf16.mxu0 0
  %1357 = vmatmul.mubr.bf16.gmra.mxu0 %v1303
  %v1358 = vpop.f32.mrf.mxu0
  %v1359 = vadd.f32 %v1282, %v1358
  %v1360 = vpop.f32.mrf.mxu0
  %v1361 = vpop.f32.mrf.mxu0
  %v1362 = vadd.f32 %v1285, %v1361
  %v1363 = vpop.f32.mrf.mxu0
  %1364 = vmatprep.mubr.bf16.mxu0 0
  %1365 = vmatmul.mubr.bf16.gmra.mxu0 %v1306
  %v1366 = vpop.f32.mrf.mxu0
  %v1367 = vadd.f32 %v1290, %v1366
  %v1368 = vpop.f32.mrf.mxu0
  %v1369 = vpop.f32.mrf.mxu0
  %v1370 = vadd.f32 %v1293, %v1369
  %v1371 = vpop.f32.mrf.mxu0
  %1372 = vdwg.mxu0
  %v1373 = vlaneseq
  %v1374 = vshrl.u32 %v1373, 7
  %v1375 = vsub.s32 2, %v1374
  %v1376 = vrot.slane %v726, %v1375
  %v1377 = vadd.f32 %v1343, %v1376
  %v1378 = vadd.f32 %v1346, %v1376
  %v1379 = vadd.f32 %v1351, %v1376
  %v1380 = vadd.f32 %v1354, %v1376
  %v1381 = vadd.f32 %v1359, %v1376
  %v1382 = vadd.f32 %v1362, %v1376
  %v1383 = vadd.f32 %v1367, %v1376
  %v1384 = vadd.f32 %v1370, %v1376
  %v1385 = vmax.f32 %v1377, 0.0
  %v1386 = vmax.f32 %v1378, 0.0
  %v1387 = vmax.f32 %v1379, 0.0
  %v1388 = vmax.f32 %v1380, 0.0
  %v1389 = vmax.f32 %v1381, 0.0
  %v1390 = vmax.f32 %v1382, 0.0
  %v1391 = vmax.f32 %v1383, 0.0
  %v1392 = vmax.f32 %v1384, 0.0
  %1393 = vst.msk [vmem:[%s4] sm:$0xff] %vm56, %v1385
  %1394 = vst.msk [vmem:[%s4 + $0x8] sm:$0xff] %vm56, %v1386
  %1395 = vst.msk [vmem:[%s4 + $0x10] sm:$0xff] %vm56, %v1387
  %1396 = vst.msk [vmem:[%s4 + $0x18] sm:$0xff] %vm56, %v1388
  %1397 = vst.msk [vmem:[%s4 + $0x20] sm:$0xff] %vm56, %v1389
  %1398 = vst.msk [vmem:[%s4 + $0x28] sm:$0xff] %vm56, %v1390
  %1399 = vst.msk [vmem:[%s4 + $0x30] sm:$0xff] %vm56, %v1391
  %1400 = vst.msk [vmem:[%s4 + $0x38] sm:$0xff] %vm56, %v1392
  // Predicated region
  $region18: #{graph_autoencoder_forward.1} parent=0 // pred_check
    _
  $region19: #{graph_autoencoder_forward.1} parent=0 // pred_check_branch
    %1402 = sbr.rel (0) target = $region21
  $region20: #{graph_autoencoder_forward.1} parent=0 // pred_region
    _
  $region21: #{graph_autoencoder_forward.1} parent=0 // pred_fallthru
    _
  // Predicated region
  $region22: #{graph_autoencoder_forward.1} parent=0 // pred_check
    _
  $region23: #{graph_autoencoder_forward.1} parent=0 // pred_check_branch
    %1404 = sbr.rel (0) target = $region25
  $region24: #{graph_autoencoder_forward.1} parent=0 // pred_region
    _
  $region25: #{graph_autoencoder_forward.1} parent=0 // pred_fallthru
    _

</llo_original>
